<compile_context>
chip_gen: v6e
topology: v6e:2x2x1
jax: 0.10.0
libtpu: 0.0.40
codegen_flags: <defaults>
</compile_context>

<pallas_src>
import functools

import jax
import jax.numpy as jnp
from jax.experimental import pallas as pl
from jax.experimental.pallas import tpu as pltpu

EPS = 1e-5                      # nn.BatchNorm2d default eps
_VMEM_TILE_BUDGET = 16 * 1024 * 1024   # working-set budget for TM derivation
_VMEM_LIMIT = 32 * 1024 * 1024         # scoped VMEM limit passed to Mosaic


def _round_up(x, m):
    return ((x + m - 1) // m) * m


# ---------------------------------------------------------------------------
# Kernels
# ---------------------------------------------------------------------------
def stats_kernel(p_ref, w_ref, s_ref):
    """Pass 1: per-channel sum and sum-of-squares of (patches @ W).

    p_ref: (TM, Kc_pad)   w_ref: (Kc_pad, C_pad)   s_ref: (2, C_pad)
    s_ref row 0 = sum, row 1 = sumsq, accumulated across the M grid.
    """
    y = jnp.dot(p_ref[...], w_ref[...], preferred_element_type=jnp.float32)
    # Column sums on the MXU (ones @ y) instead of XLU sublane reductions.
    ones = jnp.ones((1, y.shape[0]), dtype=jnp.float32)
    s = jnp.dot(ones, y, preferred_element_type=jnp.float32)        # (1, C_pad)
    ss = jnp.dot(ones, y * y, preferred_element_type=jnp.float32)   # (1, C_pad)
    upd = jnp.concatenate([s, ss], axis=0)                          # (2, C_pad)

    @pl.when(pl.program_id(0) == 0)
    def _init():
        s_ref[...] = upd

    @pl.when(pl.program_id(0) > 0)
    def _acc():
        s_ref[...] = s_ref[...] + upd


def apply_kernel(p_ref, w_ref, shift_ref, o_ref, *, use_act):
    """Pass 2: y = relu(patches @ W_folded + shift).

    BN scale is already folded into W_folded; shift = beta - mean*scale.
    p_ref: (TM, Kc_pad)  w_ref: (Kc_pad, C_pad)  shift_ref: (1, C_pad)
    o_ref: (TM, C_pad)  (lane-dense: C_pad % 128 == 0)
    """
    y = jnp.dot(p_ref[...], w_ref[...], preferred_element_type=jnp.float32)
    y = y + shift_ref[...]
    if use_act:
        y = jnp.maximum(y, 0.0)
    o_ref[...] = y


# ---------------------------------------------------------------------------
# Host-side glue
# ---------------------------------------------------------------------------
def _im2col_nhwc(x_nhwc, k, s, p):
    """x (N,H,W,C) -> patches (N*Ho*Wo, K*K*C) ordered (kh, kw, c)."""
    n, h, w, c = x_nhwc.shape
    xp = jnp.pad(x_nhwc, ((0, 0), (p, p), (p, p), (0, 0)))
    ho = (h + 2 * p - k) // s + 1
    wo = (w + 2 * p - k) // s + 1
    cols = []
    for kh in range(k):
        for kw in range(k):
            sl = xp[:, kh: kh + (ho - 1) * s + 1: s,
                    kw: kw + (wo - 1) * s + 1: s, :]                # (N,Ho,Wo,C)
            cols.append(sl)
    patches = jnp.concatenate(cols, axis=-1)                        # (N,Ho,Wo,K*K*C)
    return patches.reshape(n * ho * wo, k * k * c), ho, wo


def _derive_block_m(m, kc_pad, c_pad, in_itemsize):
    """Largest TM (multiple of 8, <=2048) whose double-buffered working set
    (patch tile + f32 output tile + resident weights) fits the VMEM budget.
    Keeps tiles well under v7x's smaller scoped VMEM."""
    weight_bytes = 2 * kc_pad * c_pad * 4
    per_row = 2 * (kc_pad * in_itemsize + c_pad * 4)
    rows = max(8, (_VMEM_TILE_BUDGET - weight_bytes) // max(per_row, 1))
    tm = max(8, (min(2048, rows) // 8) * 8)
    return min(tm, _round_up(m, 8))


@functools.partial(
    jax.jit,
    static_argnames=("stride", "padding", "use_act", "block_m", "matmul_dtype"))
def conv_block(x, conv_w, conv_b, bn_gamma, bn_beta, *, stride, padding,
               use_act=True, block_m=None, matmul_dtype=jnp.float32):
    """x: (N, Cin, H, W) NCHW. conv_w: (Cout, Cin, K, K). Returns (N, Cout, Ho, Wo).

    Matches PyTorch ConvBlock forward with BatchNorm2d in training mode.
    conv_b is accepted for API parity but is mathematically cancelled by the
    train-mode BN mean subtraction, so it is never used.
    """
    del conv_b  # cancelled by train-mode BN (mean subtraction); variance unchanged.

    n = x.shape[0]
    cout, cin, k, _ = conv_w.shape

    # NHWC internally (lane dim = channels / Kc).
    x_nhwc = jnp.transpose(x, (0, 2, 3, 1))
    patches, ho, wo = _im2col_nhwc(x_nhwc, k, stride, padding)      # (M, Kc)
    m, kc = patches.shape

    kc_pad = _round_up(kc, 8)           # f32 sublane alignment of the K dim
    c_pad = _round_up(cout, 128)        # lane-dense output columns

    in_itemsize = jnp.dtype(matmul_dtype).itemsize
    if block_m is None:
        tm = _derive_block_m(m, kc_pad, c_pad, in_itemsize)
    else:
        tm = min(max(8, _round_up(block_m, 8)), _round_up(m, 8))
    m_pad = _round_up(m, tm)
    n_tiles = m_pad // tm

    # Zero-padding: extra rows/cols contribute 0 to sums and are sliced off.
    patches_p = jnp.pad(patches, ((0, m_pad - m), (0, kc_pad - kc)))
    patches_p = patches_p.astype(matmul_dtype)
    w2 = jnp.transpose(conv_w, (2, 3, 1, 0)).reshape(kc, cout)      # (Kc, Cout), (kh,kw,cin) order
    w2p = jnp.pad(w2, ((0, kc_pad - kc), (0, c_pad - cout)))

    # ---- Pass 1: global per-channel batch statistics -----------------------
    stats = pl.pallas_call(
        stats_kernel,
        out_shape=jax.ShapeDtypeStruct((2, c_pad), jnp.float32),
        grid=(n_tiles,),
        in_specs=[
            pl.BlockSpec((tm, kc_pad), lambda i: (i, 0)),
            pl.BlockSpec((kc_pad, c_pad), lambda i: (0, 0)),
        ],
        out_specs=pl.BlockSpec((2, c_pad), lambda i: (0, 0)),
        compiler_params=pltpu.CompilerParams(
            dimension_semantics=("arbitrary",),      # grid-resident accumulator
            vmem_limit_bytes=_VMEM_LIMIT),
    )(patches_p, w2p.astype(matmul_dtype))

    count = jnp.float32(m)                                          # N*Ho*Wo
    mean = stats[0] / count
    # One-pass variance; clamp guards the tiny negative from f32 cancellation.
    var = jnp.maximum(stats[1] / count - mean * mean, 0.0)
    rstd = jax.lax.rsqrt(var + EPS)

    gamma_p = jnp.pad(bn_gamma.astype(jnp.float32), (0, c_pad - cout))
    beta_p = jnp.pad(bn_beta.astype(jnp.float32), (0, c_pad - cout))
    scale = gamma_p * rstd                                          # (C_pad,)
    shift = (beta_p - mean * scale).reshape(1, c_pad)               # (1, C_pad)
    w_fold = (w2p * scale[None, :]).astype(matmul_dtype)            # fold BN scale into W

    # ---- Pass 2: matmul + shift + ReLU (lane-dense output) -----------------
    y = pl.pallas_call(
        functools.partial(apply_kernel, use_act=use_act),
        out_shape=jax.ShapeDtypeStruct((m_pad, c_pad), jnp.float32),
        grid=(n_tiles,),
        in_specs=[
            pl.BlockSpec((tm, kc_pad), lambda i: (i, 0)),
            pl.BlockSpec((kc_pad, c_pad), lambda i: (0, 0)),
            pl.BlockSpec((1, c_pad), lambda i: (0, 0)),
        ],
        out_specs=pl.BlockSpec((tm, c_pad), lambda i: (i, 0)),
        compiler_params=pltpu.CompilerParams(
            dimension_semantics=("parallel",),       # independent M tiles (v7x 2 TCs)
            vmem_limit_bytes=_VMEM_LIMIT),
    )(patches_p, w_fold, shift)

    y = y[:m, :cout].reshape(n, ho, wo, cout)                       # drop padding
    return jnp.transpose(y, (0, 3, 1, 2))                           # back to NCHW


def conv_block_ref(x, conv_w, conv_b, bn_gamma, bn_beta, *, stride, padding,
                   use_act=True):
    """Pure-JAX reference of the PyTorch forward (BN in training mode)."""
    y = jax.lax.conv_general_dilated(
        x, conv_w, window_strides=(stride, stride),
        padding=((padding, padding), (padding, padding)),
        dimension_numbers=("NCHW", "OIHW", "NCHW"),
    ) + conv_b.reshape(1, -1, 1, 1)
    mean = jnp.mean(y, axis=(0, 2, 3), keepdims=True)
    var = jnp.mean((y - mean) ** 2, axis=(0, 2, 3), keepdims=True)
    y = (y - mean) * jax.lax.rsqrt(var + EPS)
    y = y * bn_gamma.reshape(1, -1, 1, 1) + bn_beta.reshape(1, -1, 1, 1)
    return jnp.maximum(y, 0.0) if use_act else y


if __name__ == "__main__":
    key = jax.random.PRNGKey(0)
    kx, kw, kb, kg, kbe, kw2 = jax.random.split(key, 6)

    # Config A: classic ConvBlock (3x3, stride 1, pad 1, ReLU).
    N, CIN, COUT, K, S, P, H = 2, 4, 8, 3, 1, 1, 16
    x = jax.random.normal(kx, (N, CIN, H, H), dtype=jnp.float32)
    conv_w = jax.random.normal(kw, (COUT, CIN, K, K), dtype=jnp.float32) * 0.1
    conv_b = jax.random.normal(kb, (COUT,), dtype=jnp.float32) * 0.1
    bn_gamma = 1.0 + 0.1 * jax.random.normal(kg, (COUT,), dtype=jnp.float32)
    bn_beta = 0.05 * jax.random.normal(kbe, (COUT,), dtype=jnp.float32)

    out_auto = jax.block_until_ready(
        conv_block(x, conv_w, conv_b, bn_gamma, bn_beta,
                   stride=S, padding=P, use_act=True))
    out_tiled = jax.block_until_ready(
        conv_block(x, conv_w, conv_b, bn_gamma, bn_beta,
                   stride=S, padding=P, use_act=True, block_m=128))
    ref = conv_block_ref(x, conv_w, conv_b, bn_gamma, bn_beta,
                         stride=S, padding=P, use_act=True)
    assert out_auto.shape == (N, COUT, H, H)
    assert jnp.allclose(out_auto, ref, atol=1e-4, rtol=1e-4), "mismatch (auto tile)"
    assert jnp.allclose(out_tiled, ref, atol=1e-4, rtol=1e-4), "mismatch (TM=128)"

    # Config B: downsampling block (4x4, stride 2, pad 1, no activation),
    # multi-step grid (block_m=64) to exercise cross-tile stat accumulation.
    K2, S2, P2 = 4, 2, 1
    conv_w2 = jax.random.normal(kw2, (COUT, CIN, K2, K2), dtype=jnp.float32) * 0.1
    out_b = jax.block_until_ready(
        conv_block(x, conv_w2, conv_b, bn_gamma, bn_beta,
                   stride=S2, padding=P2, use_act=False, block_m=64))
    ref_b = conv_block_ref(x, conv_w2, conv_b, bn_gamma, bn_beta,
                           stride=S2, padding=P2, use_act=False)
    assert out_b.shape == ref_b.shape
    assert jnp.allclose(out_b, ref_b, atol=1e-4, rtol=1e-4), "mismatch (stride-2)"

    print("KERNEL_OK")
</pallas_src>

<mosaic_0001>
module attributes {stable_mosaic.version = 11 : i64} {
  func.func @stats_kernel(%arg0: i32, %arg1: memref<512x40xf32, #tpu.memory_space<vmem>>, %arg2: memref<40x128xf32, #tpu.memory_space<vmem>>, %arg3: memref<2x128xf32, #tpu.memory_space<vmem>>) attributes {dimension_semantics = [#tpu.dimension_semantics<arbitrary>], iteration_bounds = array<i64: 1>, scalar_prefetch = 0 : i64, scratch_operands = 0 : i64, tpu.core_type = #tpu.core_type<tc>, window_params = [{transform_indices = @transform_0, window_bounds = array<i64: 512, 40>}, {pipeline_mode = #tpu.pipeline_mode<synchronous>, transform_indices = @transform_1, window_bounds = array<i64: 40, 128>}, {pipeline_mode = #tpu.pipeline_mode<synchronous>, transform_indices = @transform_2, window_bounds = array<i64: 2, 128>}]} {
    %c0 = arith.constant 0 : index
    %c0_0 = arith.constant 0 : index
    %0 = vector.load %arg1[%c0, %c0_0] : memref<512x40xf32, #tpu.memory_space<vmem>>, vector<512x40xf32>
    %c0_1 = arith.constant 0 : index
    %c0_2 = arith.constant 0 : index
    %1 = vector.load %arg2[%c0_1, %c0_2] : memref<40x128xf32, #tpu.memory_space<vmem>>, vector<40x128xf32>
    %cst = arith.constant dense<0.000000e+00> : vector<512x128xf32>
    %2 = tpu.matmul %0, %1, %cst {dimension_numbers = #tpu.dot_dimension_numbers<[1], [0], [0], [1], [0, 0, 1, 1], [], []>} : vector<512x40xf32>, vector<40x128xf32>, vector<512x128xf32> -> vector<512x128xf32>
    %cst_3 = arith.constant 1.000000e+00 : f32
    %3 = vector.broadcast %cst_3 : f32 to vector<1x512xf32>
    %cst_4 = arith.constant dense<0.000000e+00> : vector<1x128xf32>
    %4 = tpu.matmul %3, %2, %cst_4 {dimension_numbers = #tpu.dot_dimension_numbers<[1], [0], [0], [1], [0, 0, 1, 1], [], []>} : vector<1x512xf32>, vector<512x128xf32>, vector<1x128xf32> -> vector<1x128xf32>
    %5 = arith.mulf %2, %2 : vector<512x128xf32>
    %cst_5 = arith.constant dense<0.000000e+00> : vector<1x128xf32>
    %6 = tpu.matmul %3, %5, %cst_5 {dimension_numbers = #tpu.dot_dimension_numbers<[1], [0], [0], [1], [0, 0, 1, 1], [], []>} : vector<1x512xf32>, vector<512x128xf32>, vector<1x128xf32> -> vector<1x128xf32>
    %7 = tpu.concatenate %4, %6 in 0 : vector<1x128xf32>, vector<1x128xf32> -> vector<2x128xf32>
    %c0_i32 = arith.constant 0 : i32
    %8 = arith.cmpi eq, %arg0, %c0_i32 : i32
    %9 = arith.extui %8 : i1 to i32
    %c0_i32_6 = arith.constant 0 : i32
    %10 = arith.cmpi ne, %9, %c0_i32_6 : i32
    scf.if %10 {
      %c0_9 = arith.constant 0 : index
      %c0_10 = arith.constant 0 : index
      %14 = vector.load %arg3[%c0_9, %c0_10] : memref<2x128xf32, #tpu.memory_space<vmem>>, vector<2x128xf32>
      tpu.vector_store %arg3[%c0_9, %c0_10], %7 {strides = array<i32>} : memref<2x128xf32, #tpu.memory_space<vmem>>, vector<2x128xf32>,
    } else {
    }
    %c0_i32_7 = arith.constant 0 : i32
    %11 = arith.cmpi sgt, %arg0, %c0_i32_7 : i32
    %12 = arith.extui %11 : i1 to i32
    %c0_i32_8 = arith.constant 0 : i32
    %13 = arith.cmpi ne, %12, %c0_i32_8 : i32
    scf.if %13 {
      %c0_9 = arith.constant 0 : index
      %c0_10 = arith.constant 0 : index
      %14 = vector.load %arg3[%c0_9, %c0_10] : memref<2x128xf32, #tpu.memory_space<vmem>>, vector<2x128xf32>
      %15 = arith.addf %14, %7 : vector<2x128xf32>
      %c0_11 = arith.constant 0 : index
      %c0_12 = arith.constant 0 : index
      %16 = vector.load %arg3[%c0_11, %c0_12] : memref<2x128xf32, #tpu.memory_space<vmem>>, vector<2x128xf32>
      tpu.vector_store %arg3[%c0_11, %c0_12], %15 {strides = array<i32>} : memref<2x128xf32, #tpu.memory_space<vmem>>, vector<2x128xf32>,
    } else {
    }
    return
  }
  func.func @transform_0(%arg0: i32) -> (i32, i32) {
    %c0_i32 = arith.constant 0 : i32
    %c0_i32_0 = arith.constant 0 : i32
    return %arg0, %c0_i32 : i32, i32
  }
  func.func @transform_1(%arg0: i32) -> (i32, i32) {
    %c0_i32 = arith.constant 0 : i32
    %c0_i32_0 = arith.constant 0 : i32
    %c0_i32_1 = arith.constant 0 : i32
    return %c0_i32, %c0_i32_0 : i32, i32
  }
  func.func @transform_2(%arg0: i32) -> (i32, i32) {
    %c0_i32 = arith.constant 0 : i32
    %c0_i32_0 = arith.constant 0 : i32
    %c0_i32_1 = arith.constant 0 : i32
    return %c0_i32, %c0_i32_0 : i32, i32
  }
}

module attributes {stable_mosaic.version = 11 : i64} {
  func.func @apply_kernel(%arg0: i32, %arg1: memref<512x40xf32, #tpu.memory_space<vmem>>, %arg2: memref<40x128xf32, #tpu.memory_space<vmem>>, %arg3: memref<1x128xf32, #tpu.memory_space<vmem>>, %arg4: memref<512x128xf32, #tpu.memory_space<vmem>>) attributes {dimension_semantics = [#tpu.dimension_semantics<parallel>], iteration_bounds = array<i64: 1>, scalar_prefetch = 0 : i64, scratch_operands = 0 : i64, tpu.core_type = #tpu.core_type<tc>, window_params = [{transform_indices = @transform_0, window_bounds = array<i64: 512, 40>}, {pipeline_mode = #tpu.pipeline_mode<synchronous>, transform_indices = @transform_1, window_bounds = array<i64: 40, 128>}, {pipeline_mode = #tpu.pipeline_mode<synchronous>, transform_indices = @transform_2, window_bounds = array<i64: 1, 128>}, {transform_indices = @transform_3, window_bounds = array<i64: 512, 128>}]} {
    %c0 = arith.constant 0 : index
    %c0_0 = arith.constant 0 : index
    %0 = vector.load %arg1[%c0, %c0_0] : memref<512x40xf32, #tpu.memory_space<vmem>>, vector<512x40xf32>
    %c0_1 = arith.constant 0 : index
    %c0_2 = arith.constant 0 : index
    %1 = vector.load %arg2[%c0_1, %c0_2] : memref<40x128xf32, #tpu.memory_space<vmem>>, vector<40x128xf32>
    %cst = arith.constant dense<0.000000e+00> : vector<512x128xf32>
    %2 = tpu.matmul %0, %1, %cst {dimension_numbers = #tpu.dot_dimension_numbers<[1], [0], [0], [1], [0, 0, 1, 1], [], []>} : vector<512x40xf32>, vector<40x128xf32>, vector<512x128xf32> -> vector<512x128xf32>
    %c0_3 = arith.constant 0 : index
    %c0_4 = arith.constant 0 : index
    %3 = vector.load %arg3[%c0_3, %c0_4] : memref<1x128xf32, #tpu.memory_space<vmem>>, vector<1x128xf32>
    %4 = vector.broadcast %3 : vector<1x128xf32> to vector<512x128xf32>
    %5 = arith.addf %2, %4 : vector<512x128xf32>
    %cst_5 = arith.constant 0.000000e+00 : f32
    %6 = vector.broadcast %cst_5 : f32 to vector<512x128xf32>
    %7 = arith.maximumf %5, %6 : vector<512x128xf32>
    %c0_6 = arith.constant 0 : index
    %c0_7 = arith.constant 0 : index
    %8 = vector.load %arg4[%c0_6, %c0_7] : memref<512x128xf32, #tpu.memory_space<vmem>>, vector<512x128xf32>
    tpu.vector_store %arg4[%c0_6, %c0_7], %7 {strides = array<i32>} : memref<512x128xf32, #tpu.memory_space<vmem>>, vector<512x128xf32>,
    return
  }
  func.func @transform_0(%arg0: i32) -> (i32, i32) {
    %c0_i32 = arith.constant 0 : i32
    %c0_i32_0 = arith.constant 0 : i32
    return %arg0, %c0_i32 : i32, i32
  }
  func.func @transform_1(%arg0: i32) -> (i32, i32) {
    %c0_i32 = arith.constant 0 : i32
    %c0_i32_0 = arith.constant 0 : i32
    %c0_i32_1 = arith.constant 0 : i32
    return %c0_i32, %c0_i32_0 : i32, i32
  }
  func.func @transform_2(%arg0: i32) -> (i32, i32) {
    %c0_i32 = arith.constant 0 : i32
    %c0_i32_0 = arith.constant 0 : i32
    %c0_i32_1 = arith.constant 0 : i32
    return %c0_i32, %c0_i32_0 : i32, i32
  }
  func.func @transform_3(%arg0: i32) -> (i32, i32) {
    %c0_i32 = arith.constant 0 : i32
    %c0_i32_0 = arith.constant 0 : i32
    return %arg0, %c0_i32 : i32, i32
  }
}

</mosaic_0001>

<llo_original>
// kernel: conv_block.2
$region0: #{conv_block.2}
  #allocation0 [shape = 'u32[]', space=smem, size = 0x4, offset = 0x4, fixed_abs, tag = 'smem constant byte address 0x4 - core index']
  #allocation1 [shape = 'u32[144,128]{1,0:T(1,128)}', space=vmem, size = 0x12000, scoped, tag = 'internal scratch']
  %s0 = inlined_call_operand.vmem [shape: f32[512,40], index: 0, kind: input, shape index: {}]
  %s1 = inlined_call_operand.vmem [shape: f32[40,128], index: 1, kind: input, shape index: {}]
  %s2 = inlined_call_operand.vmem [shape: f32[2,128], index: 2, kind: output, shape index: {}]
  %s3 = sld [smem:[#allocation0]]
  $region26: #{conv_block.2} parent=0
    _
  %s5 = ssub.s32 1, %s3
  %s6 = scalar_select 0, %s5, %s3
  // Predicated region
  $region2: #{conv_block.2} parent=0 // pred_check
    _
  $region3: #{conv_block.2} parent=0 // pred_check_branch
    %8 = sbr.rel (0) target = $region5
  $region4: #{conv_block.2} parent=0 // pred_region
    _
  $region5: #{conv_block.2} parent=0 // pred_fallthru
    _
  // Predicated region
  $region6: #{conv_block.2} parent=0 // pred_check
    _
  $region7: #{conv_block.2} parent=0 // pred_check_branch
    %10 = sbr.rel (0) target = $region9
  $region8: #{conv_block.2} parent=0 // pred_region
    _
  $region9: #{conv_block.2} parent=0 // pred_fallthru
    _
  %v11 = vld [vmem:[%s0] sm:$0xff]
  %v12 = vld [vmem:[%s0 + $0x8] sm:$0xff]
  %v13 = vld [vmem:[%s0 + $0x10] sm:$0xff]
  %v14 = vld [vmem:[%s0 + $0x18] sm:$0xff]
  %v15 = vld [vmem:[%s0 + $0x20] sm:$0xff]
  %v16 = vld [vmem:[%s0 + $0x28] sm:$0xff]
  %v17 = vld [vmem:[%s0 + $0x30] sm:$0xff]
  %v18 = vld [vmem:[%s0 + $0x38] sm:$0xff]
  %v19 = vld [vmem:[%s0 + $0x40] sm:$0xff]
  %v20 = vld [vmem:[%s0 + $0x48] sm:$0xff]
  %v21 = vld [vmem:[%s0 + $0x50] sm:$0xff]
  %v22 = vld [vmem:[%s0 + $0x58] sm:$0xff]
  %v23 = vld [vmem:[%s0 + $0x60] sm:$0xff]
  %v24 = vld [vmem:[%s0 + $0x68] sm:$0xff]
  %v25 = vld [vmem:[%s0 + $0x70] sm:$0xff]
  %v26 = vld [vmem:[%s0 + $0x78] sm:$0xff]
  %v27 = vld [vmem:[%s0 + $0x80] sm:$0xff]
  %v28 = vld [vmem:[%s0 + $0x88] sm:$0xff]
  %v29 = vld [vmem:[%s0 + $0x90] sm:$0xff]
  %v30 = vld [vmem:[%s0 + $0x98] sm:$0xff]
  %v31 = vld [vmem:[%s0 + $0xa0] sm:$0xff]
  %v32 = vld [vmem:[%s0 + $0xa8] sm:$0xff]
  %v33 = vld [vmem:[%s0 + $0xb0] sm:$0xff]
  %v34 = vld [vmem:[%s0 + $0xb8] sm:$0xff]
  %v35 = vld [vmem:[%s0 + $0xc0] sm:$0xff]
  %v36 = vld [vmem:[%s0 + $0xc8] sm:$0xff]
  %v37 = vld [vmem:[%s0 + $0xd0] sm:$0xff]
  %v38 = vld [vmem:[%s0 + $0xd8] sm:$0xff]
  %v39 = vld [vmem:[%s0 + $0xe0] sm:$0xff]
  %v40 = vld [vmem:[%s0 + $0xe8] sm:$0xff]
  %v41 = vld [vmem:[%s0 + $0xf0] sm:$0xff]
  %v42 = vld [vmem:[%s0 + $0xf8] sm:$0xff]
  %v43 = vld [vmem:[%s0 + $0x100] sm:$0xff]
  %v44 = vld [vmem:[%s0 + $0x108] sm:$0xff]
  %v45 = vld [vmem:[%s0 + $0x110] sm:$0xff]
  %v46 = vld [vmem:[%s0 + $0x118] sm:$0xff]
  %v47 = vld [vmem:[%s0 + $0x120] sm:$0xff]
  %v48 = vld [vmem:[%s0 + $0x128] sm:$0xff]
  %v49 = vld [vmem:[%s0 + $0x130] sm:$0xff]
  %v50 = vld [vmem:[%s0 + $0x138] sm:$0xff]
  %v51 = vld [vmem:[%s0 + $0x140] sm:$0xff]
  %v52 = vld [vmem:[%s0 + $0x148] sm:$0xff]
  %v53 = vld [vmem:[%s0 + $0x150] sm:$0xff]
  %v54 = vld [vmem:[%s0 + $0x158] sm:$0xff]
  %v55 = vld [vmem:[%s0 + $0x160] sm:$0xff]
  %v56 = vld [vmem:[%s0 + $0x168] sm:$0xff]
  %v57 = vld [vmem:[%s0 + $0x170] sm:$0xff]
  %v58 = vld [vmem:[%s0 + $0x178] sm:$0xff]
  %v59 = vld [vmem:[%s0 + $0x180] sm:$0xff]
  %v60 = vld [vmem:[%s0 + $0x188] sm:$0xff]
  %v61 = vld [vmem:[%s0 + $0x190] sm:$0xff]
  %v62 = vld [vmem:[%s0 + $0x198] sm:$0xff]
  %v63 = vld [vmem:[%s0 + $0x1a0] sm:$0xff]
  %v64 = vld [vmem:[%s0 + $0x1a8] sm:$0xff]
  %v65 = vld [vmem:[%s0 + $0x1b0] sm:$0xff]
  %v66 = vld [vmem:[%s0 + $0x1b8] sm:$0xff]
  %v67 = vld [vmem:[%s0 + $0x1c0] sm:$0xff]
  %v68 = vld [vmem:[%s0 + $0x1c8] sm:$0xff]
  %v69 = vld [vmem:[%s0 + $0x1d0] sm:$0xff]
  %v70 = vld [vmem:[%s0 + $0x1d8] sm:$0xff]
  %v71 = vld [vmem:[%s0 + $0x1e0] sm:$0xff]
  %v72 = vld [vmem:[%s0 + $0x1e8] sm:$0xff]
  %v73 = vld [vmem:[%s0 + $0x1f0] sm:$0xff]
  %v74 = vld [vmem:[%s0 + $0x1f8] sm:$0xff]
  %v75 = vld [vmem:[%s1] sm:$0xff]
  %v76 = vld [vmem:[%s1 + $0x8] sm:$0xff]
  %v77 = vld [vmem:[%s1 + $0x10] sm:$0xff]
  %v78 = vld [vmem:[%s1 + $0x18] sm:$0xff]
  %v79 = vld [vmem:[%s1 + $0x20] sm:$0xff]
  %vm80 = vcmask 326656
  %v82 = vsel %vm80, %v11, 0
  %v85 = vsel %vm80, %v12, 0
  %v88 = vsel %vm80, %v13, 0
  %v91 = vsel %vm80, %v14, 0
  %v94 = vsel %vm80, %v15, 0
  %v97 = vsel %vm80, %v16, 0
  %v100 = vsel %vm80, %v17, 0
  %v103 = vsel %vm80, %v18, 0
  %v106 = vsel %vm80, %v19, 0
  %v109 = vsel %vm80, %v20, 0
  %v112 = vsel %vm80, %v21, 0
  %v115 = vsel %vm80, %v22, 0
  %v118 = vsel %vm80, %v23, 0
  %v121 = vsel %vm80, %v24, 0
  %v124 = vsel %vm80, %v25, 0
  %v127 = vsel %vm80, %v26, 0
  %v130 = vsel %vm80, %v27, 0
  %v133 = vsel %vm80, %v28, 0
  %v136 = vsel %vm80, %v29, 0
  %v139 = vsel %vm80, %v30, 0
  %v142 = vsel %vm80, %v31, 0
  %v145 = vsel %vm80, %v32, 0
  %v148 = vsel %vm80, %v33, 0
  %v151 = vsel %vm80, %v34, 0
  %v154 = vsel %vm80, %v35, 0
  %v157 = vsel %vm80, %v36, 0
  %v160 = vsel %vm80, %v37, 0
  %v163 = vsel %vm80, %v38, 0
  %v166 = vsel %vm80, %v39, 0
  %v169 = vsel %vm80, %v40, 0
  %v172 = vsel %vm80, %v41, 0
  %v175 = vsel %vm80, %v42, 0
  %v178 = vsel %vm80, %v43, 0
  %v181 = vsel %vm80, %v44, 0
  %v184 = vsel %vm80, %v45, 0
  %v187 = vsel %vm80, %v46, 0
  %v190 = vsel %vm80, %v47, 0
  %v193 = vsel %vm80, %v48, 0
  %v196 = vsel %vm80, %v49, 0
  %v199 = vsel %vm80, %v50, 0
  %v202 = vsel %vm80, %v51, 0
  %v205 = vsel %vm80, %v52, 0
  %v208 = vsel %vm80, %v53, 0
  %v211 = vsel %vm80, %v54, 0
  %v214 = vsel %vm80, %v55, 0
  %v217 = vsel %vm80, %v56, 0
  %v220 = vsel %vm80, %v57, 0
  %v223 = vsel %vm80, %v58, 0
  %v226 = vsel %vm80, %v59, 0
  %v229 = vsel %vm80, %v60, 0
  %v232 = vsel %vm80, %v61, 0
  %v235 = vsel %vm80, %v62, 0
  %v238 = vsel %vm80, %v63, 0
  %v241 = vsel %vm80, %v64, 0
  %v244 = vsel %vm80, %v65, 0
  %v247 = vsel %vm80, %v66, 0
  %v250 = vsel %vm80, %v67, 0
  %v253 = vsel %vm80, %v68, 0
  %v256 = vsel %vm80, %v69, 0
  %v259 = vsel %vm80, %v70, 0
  %v262 = vsel %vm80, %v71, 0
  %v265 = vsel %vm80, %v72, 0
  %v268 = vsel %vm80, %v73, 0
  %v271 = vsel %vm80, %v74, 0
  %273 = vmatprep.subr.mxu0 0.0
  %274 = vmatpush1.msra.mxu0 0.0
  %275 = vmatprep.subr.mxu0 0.0
  %276 = vmatpush1.msra.mxu0 0.0
  %277 = vmatprep.subr.mxu0 0.0
  %278 = vmatpush1.msra.mxu0 0.0
  %279 = vmatprep.subr.mxu0 0.0
  %280 = vmatpush1.msra.mxu0 0.0
  %281 = vmatprep.subr.mxu0 0.0
  %282 = vmatpush1.msra.mxu0 0.0
  %283 = vmatprep.subr.mxu0 0.0
  %284 = vmatpush1.msra.mxu0 0.0
  %285 = vmatprep.subr.mxu0 0.0
  %286 = vmatpush1.msra.mxu0 0.0
  %287 = vmatprep.subr.mxu0 0.0
  %288 = vmatpush1.msra.mxu0 0.0
  %289 = vmatprep.subr.mxu0 0.0
  %290 = vmatpush1.msra.mxu0 0.0
  %291 = vmatprep.subr.mxu0 0.0
  %292 = vmatpush1.msra.mxu0 0.0
  %293 = vmatprep.subr.mxu0 0.0
  %294 = vmatpush1.msra.mxu0 0.0
  %295 = vmatprep.subr.mxu0 0.0
  %296 = vmatpush1.msra.mxu0 %v79
  %297 = vmatprep.subr.mxu0 0.0
  %298 = vmatpush1.msra.mxu0 %v78
  %299 = vmatprep.subr.mxu0 0.0
  %300 = vmatpush1.msra.mxu0 %v77
  %301 = vmatprep.subr.mxu0 0.0
  %302 = vmatpush1.msra.mxu0 %v76
  %303 = vmatprep.subr.mxu0 0.0
  %304 = vmatpush1.msra.mxu0 %v75
  %305 = vmatprep.subr.mxu0 0.0
  %306 = vmatpush2.msra.mxu0 0.0
  %307 = vmatprep.subr.mxu0 0.0
  %308 = vmatpush2.msra.mxu0 0.0
  %309 = vmatprep.subr.mxu0 0.0
  %310 = vmatpush2.msra.mxu0 0.0
  %311 = vmatprep.subr.mxu0 0.0
  %312 = vmatpush2.msra.mxu0 0.0
  %313 = vmatprep.subr.mxu0 0.0
  %314 = vmatpush2.msra.mxu0 0.0
  %315 = vmatprep.subr.mxu0 0.0
  %316 = vmatpush2.msra.mxu0 0.0
  %317 = vmatprep.subr.mxu0 0.0
  %318 = vmatpush2.msra.mxu0 0.0
  %319 = vmatprep.subr.mxu0 0.0
  %320 = vmatpush2.msra.mxu0 0.0
  %321 = vmatprep.subr.mxu0 0.0
  %322 = vmatpush2.msra.mxu0 0.0
  %323 = vmatprep.subr.mxu0 0.0
  %324 = vmatpush2.msra.mxu0 0.0
  %325 = vmatprep.subr.mxu0 0.0
  %326 = vmatpush2.msra.mxu0 0.0
  %327 = vmatprep.subr.mxu0 0.0
  %328 = vmatpush2.msra.mxu0 0.0
  %329 = vmatprep.subr.mxu0 0.0
  %330 = vmatpush2.msra.mxu0 0.0
  %331 = vmatprep.subr.mxu0 0.0
  %332 = vmatpush2.msra.mxu0 0.0
  %333 = vmatprep.subr.mxu0 0.0
  %334 = vmatpush2.msra.mxu0 0.0
  %335 = vmatprep.subr.mxu0 0.0
  %336 = vmatpush2.msra.mxu0 0.0
  %337 = vmatprep.mubr.f32.mxu0 0.0
  %338 = vmatmul.mubr.f32.gmra.mxu0 %v82
  %v339 = vpop.f32.mrf.mxu0
  %v340 = vadd.f32 0.0, %v339
  %v341 = vpop.f32.mrf.mxu0
  %342 = vmatprep.mubr.f32.mxu0 0.0
  %343 = vmatmul.mubr.f32.gmra.mxu0 %v85
  %v344 = vpop.f32.mrf.mxu0
  %v345 = vadd.f32 0.0, %v344
  %v346 = vpop.f32.mrf.mxu0
  %347 = vmatprep.mubr.f32.mxu0 0.0
  %348 = vmatmul.mubr.f32.gmra.mxu0 %v88
  %v349 = vpop.f32.mrf.mxu0
  %v350 = vadd.f32 0.0, %v349
  %v351 = vpop.f32.mrf.mxu0
  %352 = vmatprep.mubr.f32.mxu0 0.0
  %353 = vmatmul.mubr.f32.gmra.mxu0 %v91
  %v354 = vpop.f32.mrf.mxu0
  %v355 = vadd.f32 0.0, %v354
  %v356 = vpop.f32.mrf.mxu0
  %357 = vmatprep.mubr.f32.mxu0 0.0
  %358 = vmatmul.mubr.f32.gmra.mxu0 %v94
  %v359 = vpop.f32.mrf.mxu0
  %v360 = vadd.f32 0.0, %v359
  %v361 = vpop.f32.mrf.mxu0
  %362 = vmatprep.mubr.f32.mxu0 0.0
  %363 = vmatmul.mubr.f32.gmra.mxu0 %v97
  %v364 = vpop.f32.mrf.mxu0
  %v365 = vadd.f32 0.0, %v364
  %v366 = vpop.f32.mrf.mxu0
  %367 = vmatprep.mubr.f32.mxu0 0.0
  %368 = vmatmul.mubr.f32.gmra.mxu0 %v100
  %v369 = vpop.f32.mrf.mxu0
  %v370 = vadd.f32 0.0, %v369
  %v371 = vpop.f32.mrf.mxu0
  %372 = vmatprep.mubr.f32.mxu0 0.0
  %373 = vmatmul.mubr.f32.gmra.mxu0 %v103
  %v374 = vpop.f32.mrf.mxu0
  %v375 = vadd.f32 0.0, %v374
  %v376 = vpop.f32.mrf.mxu0
  %377 = vmatprep.mubr.f32.mxu0 0.0
  %378 = vmatmul.mubr.f32.gmra.mxu0 %v106
  %v379 = vpop.f32.mrf.mxu0
  %v380 = vadd.f32 0.0, %v379
  %v381 = vpop.f32.mrf.mxu0
  %382 = vmatprep.mubr.f32.mxu0 0.0
  %383 = vmatmul.mubr.f32.gmra.mxu0 %v109
  %v384 = vpop.f32.mrf.mxu0
  %v385 = vadd.f32 0.0, %v384
  %v386 = vpop.f32.mrf.mxu0
  %387 = vmatprep.mubr.f32.mxu0 0.0
  %388 = vmatmul.mubr.f32.gmra.mxu0 %v112
  %v389 = vpop.f32.mrf.mxu0
  %v390 = vadd.f32 0.0, %v389
  %v391 = vpop.f32.mrf.mxu0
  %392 = vmatprep.mubr.f32.mxu0 0.0
  %393 = vmatmul.mubr.f32.gmra.mxu0 %v115
  %v394 = vpop.f32.mrf.mxu0
  %v395 = vadd.f32 0.0, %v394
  %v396 = vpop.f32.mrf.mxu0
  %397 = vmatprep.mubr.f32.mxu0 0.0
  %398 = vmatmul.mubr.f32.gmra.mxu0 %v118
  %v399 = vpop.f32.mrf.mxu0
  %v400 = vadd.f32 0.0, %v399
  %v401 = vpop.f32.mrf.mxu0
  %402 = vmatprep.mubr.f32.mxu0 0.0
  %403 = vmatmul.mubr.f32.gmra.mxu0 %v121
  %v404 = vpop.f32.mrf.mxu0
  %v405 = vadd.f32 0.0, %v404
  %v406 = vpop.f32.mrf.mxu0
  %407 = vmatprep.mubr.f32.mxu0 0.0
  %408 = vmatmul.mubr.f32.gmra.mxu0 %v124
  %v409 = vpop.f32.mrf.mxu0
  %v410 = vadd.f32 0.0, %v409
  %v411 = vpop.f32.mrf.mxu0
  %412 = vmatprep.mubr.f32.mxu0 0.0
  %413 = vmatmul.mubr.f32.gmra.mxu0 %v127
  %v414 = vpop.f32.mrf.mxu0
  %v415 = vadd.f32 0.0, %v414
  %v416 = vpop.f32.mrf.mxu0
  %417 = vmatprep.mubr.f32.mxu0 0.0
  %418 = vmatmul.mubr.f32.gmra.mxu0 %v130
  %v419 = vpop.f32.mrf.mxu0
  %v420 = vadd.f32 0.0, %v419
  %v421 = vpop.f32.mrf.mxu0
  %422 = vmatprep.mubr.f32.mxu0 0.0
  %423 = vmatmul.mubr.f32.gmra.mxu0 %v133
  %v424 = vpop.f32.mrf.mxu0
  %v425 = vadd.f32 0.0, %v424
  %v426 = vpop.f32.mrf.mxu0
  %427 = vmatprep.mubr.f32.mxu0 0.0
  %428 = vmatmul.mubr.f32.gmra.mxu0 %v136
  %v429 = vpop.f32.mrf.mxu0
  %v430 = vadd.f32 0.0, %v429
  %v431 = vpop.f32.mrf.mxu0
  %432 = vmatprep.mubr.f32.mxu0 0.0
  %433 = vmatmul.mubr.f32.gmra.mxu0 %v139
  %v434 = vpop.f32.mrf.mxu0
  %v435 = vadd.f32 0.0, %v434
  %v436 = vpop.f32.mrf.mxu0
  %437 = vmatprep.mubr.f32.mxu0 0.0
  %438 = vmatmul.mubr.f32.gmra.mxu0 %v142
  %v439 = vpop.f32.mrf.mxu0
  %v440 = vadd.f32 0.0, %v439
  %v441 = vpop.f32.mrf.mxu0
  %442 = vmatprep.mubr.f32.mxu0 0.0
  %443 = vmatmul.mubr.f32.gmra.mxu0 %v145
  %v444 = vpop.f32.mrf.mxu0
  %v445 = vadd.f32 0.0, %v444
  %v446 = vpop.f32.mrf.mxu0
  %447 = vmatprep.mubr.f32.mxu0 0.0
  %448 = vmatmul.mubr.f32.gmra.mxu0 %v148
  %v449 = vpop.f32.mrf.mxu0
  %v450 = vadd.f32 0.0, %v449
  %v451 = vpop.f32.mrf.mxu0
  %452 = vmatprep.mubr.f32.mxu0 0.0
  %453 = vmatmul.mubr.f32.gmra.mxu0 %v151
  %v454 = vpop.f32.mrf.mxu0
  %v455 = vadd.f32 0.0, %v454
  %v456 = vpop.f32.mrf.mxu0
  %457 = vmatprep.mubr.f32.mxu0 0.0
  %458 = vmatmul.mubr.f32.gmra.mxu0 %v154
  %v459 = vpop.f32.mrf.mxu0
  %v460 = vadd.f32 0.0, %v459
  %v461 = vpop.f32.mrf.mxu0
  %462 = vmatprep.mubr.f32.mxu0 0.0
  %463 = vmatmul.mubr.f32.gmra.mxu0 %v157
  %v464 = vpop.f32.mrf.mxu0
  %v465 = vadd.f32 0.0, %v464
  %v466 = vpop.f32.mrf.mxu0
  %467 = vmatprep.mubr.f32.mxu0 0.0
  %468 = vmatmul.mubr.f32.gmra.mxu0 %v160
  %v469 = vpop.f32.mrf.mxu0
  %v470 = vadd.f32 0.0, %v469
  %v471 = vpop.f32.mrf.mxu0
  %472 = vmatprep.mubr.f32.mxu0 0.0
  %473 = vmatmul.mubr.f32.gmra.mxu0 %v163
  %v474 = vpop.f32.mrf.mxu0
  %v475 = vadd.f32 0.0, %v474
  %v476 = vpop.f32.mrf.mxu0
  %477 = vmatprep.mubr.f32.mxu0 0.0
  %478 = vmatmul.mubr.f32.gmra.mxu0 %v166
  %v479 = vpop.f32.mrf.mxu0
  %v480 = vadd.f32 0.0, %v479
  %v481 = vpop.f32.mrf.mxu0
  %482 = vmatprep.mubr.f32.mxu0 0.0
  %483 = vmatmul.mubr.f32.gmra.mxu0 %v169
  %v484 = vpop.f32.mrf.mxu0
  %v485 = vadd.f32 0.0, %v484
  %v486 = vpop.f32.mrf.mxu0
  %487 = vmatprep.mubr.f32.mxu0 0.0
  %488 = vmatmul.mubr.f32.gmra.mxu0 %v172
  %v489 = vpop.f32.mrf.mxu0
  %v490 = vadd.f32 0.0, %v489
  %v491 = vpop.f32.mrf.mxu0
  %492 = vmatprep.mubr.f32.mxu0 0.0
  %493 = vmatmul.mubr.f32.gmra.mxu0 %v175
  %v494 = vpop.f32.mrf.mxu0
  %v495 = vadd.f32 0.0, %v494
  %v496 = vpop.f32.mrf.mxu0
  %497 = vmatprep.mubr.f32.mxu0 0.0
  %498 = vmatmul.mubr.f32.gmra.mxu0 %v178
  %v499 = vpop.f32.mrf.mxu0
  %v500 = vadd.f32 0.0, %v499
  %v501 = vpop.f32.mrf.mxu0
  %502 = vmatprep.mubr.f32.mxu0 0.0
  %503 = vmatmul.mubr.f32.gmra.mxu0 %v181
  %v504 = vpop.f32.mrf.mxu0
  %v505 = vadd.f32 0.0, %v504
  %v506 = vpop.f32.mrf.mxu0
  %507 = vmatprep.mubr.f32.mxu0 0.0
  %508 = vmatmul.mubr.f32.gmra.mxu0 %v184
  %v509 = vpop.f32.mrf.mxu0
  %v510 = vadd.f32 0.0, %v509
  %v511 = vpop.f32.mrf.mxu0
  %512 = vmatprep.mubr.f32.mxu0 0.0
  %513 = vmatmul.mubr.f32.gmra.mxu0 %v187
  %v514 = vpop.f32.mrf.mxu0
  %v515 = vadd.f32 0.0, %v514
  %v516 = vpop.f32.mrf.mxu0
  %517 = vmatprep.mubr.f32.mxu0 0.0
  %518 = vmatmul.mubr.f32.gmra.mxu0 %v190
  %v519 = vpop.f32.mrf.mxu0
  %v520 = vadd.f32 0.0, %v519
  %v521 = vpop.f32.mrf.mxu0
  %522 = vmatprep.mubr.f32.mxu0 0.0
  %523 = vmatmul.mubr.f32.gmra.mxu0 %v193
  %v524 = vpop.f32.mrf.mxu0
  %v525 = vadd.f32 0.0, %v524
  %v526 = vpop.f32.mrf.mxu0
  %527 = vmatprep.mubr.f32.mxu0 0.0
  %528 = vmatmul.mubr.f32.gmra.mxu0 %v196
  %v529 = vpop.f32.mrf.mxu0
  %v530 = vadd.f32 0.0, %v529
  %v531 = vpop.f32.mrf.mxu0
  %532 = vmatprep.mubr.f32.mxu0 0.0
  %533 = vmatmul.mubr.f32.gmra.mxu0 %v199
  %v534 = vpop.f32.mrf.mxu0
  %v535 = vadd.f32 0.0, %v534
  %v536 = vpop.f32.mrf.mxu0
  %537 = vmatprep.mubr.f32.mxu0 0.0
  %538 = vmatmul.mubr.f32.gmra.mxu0 %v202
  %v539 = vpop.f32.mrf.mxu0
  %v540 = vadd.f32 0.0, %v539
  %v541 = vpop.f32.mrf.mxu0
  %542 = vmatprep.mubr.f32.mxu0 0.0
  %543 = vmatmul.mubr.f32.gmra.mxu0 %v205
  %v544 = vpop.f32.mrf.mxu0
  %v545 = vadd.f32 0.0, %v544
  %v546 = vpop.f32.mrf.mxu0
  %547 = vmatprep.mubr.f32.mxu0 0.0
  %548 = vmatmul.mubr.f32.gmra.mxu0 %v208
  %v549 = vpop.f32.mrf.mxu0
  %v550 = vadd.f32 0.0, %v549
  %v551 = vpop.f32.mrf.mxu0
  %552 = vmatprep.mubr.f32.mxu0 0.0
  %553 = vmatmul.mubr.f32.gmra.mxu0 %v211
  %v554 = vpop.f32.mrf.mxu0
  %v555 = vadd.f32 0.0, %v554
  %v556 = vpop.f32.mrf.mxu0
  %557 = vmatprep.mubr.f32.mxu0 0.0
  %558 = vmatmul.mubr.f32.gmra.mxu0 %v214
  %v559 = vpop.f32.mrf.mxu0
  %v560 = vadd.f32 0.0, %v559
  %v561 = vpop.f32.mrf.mxu0
  %562 = vmatprep.mubr.f32.mxu0 0.0
  %563 = vmatmul.mubr.f32.gmra.mxu0 %v217
  %v564 = vpop.f32.mrf.mxu0
  %v565 = vadd.f32 0.0, %v564
  %v566 = vpop.f32.mrf.mxu0
  %567 = vmatprep.mubr.f32.mxu0 0.0
  %568 = vmatmul.mubr.f32.gmra.mxu0 %v220
  %v569 = vpop.f32.mrf.mxu0
  %v570 = vadd.f32 0.0, %v569
  %v571 = vpop.f32.mrf.mxu0
  %572 = vmatprep.mubr.f32.mxu0 0.0
  %573 = vmatmul.mubr.f32.gmra.mxu0 %v223
  %v574 = vpop.f32.mrf.mxu0
  %v575 = vadd.f32 0.0, %v574
  %v576 = vpop.f32.mrf.mxu0
  %577 = vmatprep.mubr.f32.mxu0 0.0
  %578 = vmatmul.mubr.f32.gmra.mxu0 %v226
  %v579 = vpop.f32.mrf.mxu0
  %v580 = vadd.f32 0.0, %v579
  %v581 = vpop.f32.mrf.mxu0
  %582 = vmatprep.mubr.f32.mxu0 0.0
  %583 = vmatmul.mubr.f32.gmra.mxu0 %v229
  %v584 = vpop.f32.mrf.mxu0
  %v585 = vadd.f32 0.0, %v584
  %v586 = vpop.f32.mrf.mxu0
  %587 = vmatprep.mubr.f32.mxu0 0.0
  %588 = vmatmul.mubr.f32.gmra.mxu0 %v232
  %v589 = vpop.f32.mrf.mxu0
  %v590 = vadd.f32 0.0, %v589
  %v591 = vpop.f32.mrf.mxu0
  %592 = vmatprep.mubr.f32.mxu0 0.0
  %593 = vmatmul.mubr.f32.gmra.mxu0 %v235
  %v594 = vpop.f32.mrf.mxu0
  %v595 = vadd.f32 0.0, %v594
  %v596 = vpop.f32.mrf.mxu0
  %597 = vmatprep.mubr.f32.mxu0 0.0
  %598 = vmatmul.mubr.f32.gmra.mxu0 %v238
  %v599 = vpop.f32.mrf.mxu0
  %v600 = vadd.f32 0.0, %v599
  %v601 = vpop.f32.mrf.mxu0
  %602 = vmatprep.mubr.f32.mxu0 0.0
  %603 = vmatmul.mubr.f32.gmra.mxu0 %v241
  %v604 = vpop.f32.mrf.mxu0
  %v605 = vadd.f32 0.0, %v604
  %v606 = vpop.f32.mrf.mxu0
  %607 = vmatprep.mubr.f32.mxu0 0.0
  %608 = vmatmul.mubr.f32.gmra.mxu0 %v244
  %v609 = vpop.f32.mrf.mxu0
  %v610 = vadd.f32 0.0, %v609
  %v611 = vpop.f32.mrf.mxu0
  %612 = vmatprep.mubr.f32.mxu0 0.0
  %613 = vmatmul.mubr.f32.gmra.mxu0 %v247
  %v614 = vpop.f32.mrf.mxu0
  %v615 = vadd.f32 0.0, %v614
  %v616 = vpop.f32.mrf.mxu0
  %617 = vmatprep.mubr.f32.mxu0 0.0
  %618 = vmatmul.mubr.f32.gmra.mxu0 %v250
  %v619 = vpop.f32.mrf.mxu0
  %v620 = vadd.f32 0.0, %v619
  %v621 = vpop.f32.mrf.mxu0
  %622 = vmatprep.mubr.f32.mxu0 0.0
  %623 = vmatmul.mubr.f32.gmra.mxu0 %v253
  %v624 = vpop.f32.mrf.mxu0
  %v625 = vadd.f32 0.0, %v624
  %v626 = vpop.f32.mrf.mxu0
  %627 = vmatprep.mubr.f32.mxu0 0.0
  %628 = vmatmul.mubr.f32.gmra.mxu0 %v256
  %v629 = vpop.f32.mrf.mxu0
  %v630 = vadd.f32 0.0, %v629
  %v631 = vpop.f32.mrf.mxu0
  %632 = vmatprep.mubr.f32.mxu0 0.0
  %633 = vmatmul.mubr.f32.gmra.mxu0 %v259
  %v634 = vpop.f32.mrf.mxu0
  %v635 = vadd.f32 0.0, %v634
  %v636 = vpop.f32.mrf.mxu0
  %637 = vmatprep.mubr.f32.mxu0 0.0
  %638 = vmatmul.mubr.f32.gmra.mxu0 %v262
  %v639 = vpop.f32.mrf.mxu0
  %v640 = vadd.f32 0.0, %v639
  %v641 = vpop.f32.mrf.mxu0
  %642 = vmatprep.mubr.f32.mxu0 0.0
  %643 = vmatmul.mubr.f32.gmra.mxu0 %v265
  %v644 = vpop.f32.mrf.mxu0
  %v645 = vadd.f32 0.0, %v644
  %v646 = vpop.f32.mrf.mxu0
  %647 = vmatprep.mubr.f32.mxu0 0.0
  %648 = vmatmul.mubr.f32.gmra.mxu0 %v268
  %v649 = vpop.f32.mrf.mxu0
  %v650 = vadd.f32 0.0, %v649
  %v651 = vpop.f32.mrf.mxu0
  %652 = vmatprep.mubr.f32.mxu0 0.0
  %653 = vmatmul.mubr.f32.gmra.mxu0 %v271
  %v654 = vpop.f32.mrf.mxu0
  %v655 = vadd.f32 0.0, %v654
  %v656 = vpop.f32.mrf.mxu0
  %657 = vdwg.mxu0
  %658 = vmatprep.subr.mxu0 0.0
  %659 = vmatpush1.msra.mxu0 %v415
  %660 = vmatprep.subr.mxu0 0.0
  %661 = vmatpush1.msra.mxu0 %v410
  %662 = vmatprep.subr.mxu0 0.0
  %663 = vmatpush1.msra.mxu0 %v405
  %664 = vmatprep.subr.mxu0 0.0
  %665 = vmatpush1.msra.mxu0 %v400
  %666 = vmatprep.subr.mxu0 0.0
  %667 = vmatpush1.msra.mxu0 %v395
  %668 = vmatprep.subr.mxu0 0.0
  %669 = vmatpush1.msra.mxu0 %v390
  %670 = vmatprep.subr.mxu0 0.0
  %671 = vmatpush1.msra.mxu0 %v385
  %672 = vmatprep.subr.mxu0 0.0
  %673 = vmatpush1.msra.mxu0 %v380
  %674 = vmatprep.subr.mxu0 0.0
  %675 = vmatpush1.msra.mxu0 %v375
  %676 = vmatprep.subr.mxu0 0.0
  %677 = vmatpush1.msra.mxu0 %v370
  %678 = vmatprep.subr.mxu0 0.0
  %679 = vmatpush1.msra.mxu0 %v365
  %680 = vmatprep.subr.mxu0 0.0
  %681 = vmatpush1.msra.mxu0 %v360
  %682 = vmatprep.subr.mxu0 0.0
  %683 = vmatpush1.msra.mxu0 %v355
  %684 = vmatprep.subr.mxu0 0.0
  %685 = vmatpush1.msra.mxu0 %v350
  %686 = vmatprep.subr.mxu0 0.0
  %687 = vmatpush1.msra.mxu0 %v345
  %688 = vmatprep.subr.mxu0 0.0
  %689 = vmatpush1.msra.mxu0 %v340
  %690 = vmatprep.subr.mxu0 0.0
  %691 = vmatpush2.msra.mxu0 %v495
  %692 = vmatprep.subr.mxu0 0.0
  %693 = vmatpush2.msra.mxu0 %v490
  %694 = vmatprep.subr.mxu0 0.0
  %695 = vmatpush2.msra.mxu0 %v485
  %696 = vmatprep.subr.mxu0 0.0
  %697 = vmatpush2.msra.mxu0 %v480
  %698 = vmatprep.subr.mxu0 0.0
  %699 = vmatpush2.msra.mxu0 %v475
  %700 = vmatprep.subr.mxu0 0.0
  %701 = vmatpush2.msra.mxu0 %v470
  %702 = vmatprep.subr.mxu0 0.0
  %703 = vmatpush2.msra.mxu0 %v465
  %704 = vmatprep.subr.mxu0 0.0
  %705 = vmatpush2.msra.mxu0 %v460
  %706 = vmatprep.subr.mxu0 0.0
  %707 = vmatpush2.msra.mxu0 %v455
  %708 = vmatprep.subr.mxu0 0.0
  %709 = vmatpush2.msra.mxu0 %v450
  %710 = vmatprep.subr.mxu0 0.0
  %711 = vmatpush2.msra.mxu0 %v445
  %712 = vmatprep.subr.mxu0 0.0
  %713 = vmatpush2.msra.mxu0 %v440
  %714 = vmatprep.subr.mxu0 0.0
  %715 = vmatpush2.msra.mxu0 %v435
  %716 = vmatprep.subr.mxu0 0.0
  %717 = vmatpush2.msra.mxu0 %v430
  %718 = vmatprep.subr.mxu0 0.0
  %719 = vmatpush2.msra.mxu0 %v425
  %720 = vmatprep.subr.mxu0 0.0
  %721 = vmatpush2.msra.mxu0 %v420
  %722 = vmatprep.mubr.f32.mxu0 1.0
  %723 = vmatmul.mubr.f32.gmra.mxu0 1.0
  %v724 = vpop.f32.mrf.mxu0
  %v725 = vadd.f32 0.0, %v724
  %v726 = vpop.f32.mrf.mxu0
  %727 = vdwg.mxu0
  %728 = vmatprep.subr.mxu0 0.0
  %729 = vmatpush1.msra.mxu0 %v575
  %730 = vmatprep.subr.mxu0 0.0
  %731 = vmatpush1.msra.mxu0 %v570
  %732 = vmatprep.subr.mxu0 0.0
  %733 = vmatpush1.msra.mxu0 %v565
  %734 = vmatprep.subr.mxu0 0.0
  %735 = vmatpush1.msra.mxu0 %v560
  %736 = vmatprep.subr.mxu0 0.0
  %737 = vmatpush1.msra.mxu0 %v555
  %738 = vmatprep.subr.mxu0 0.0
  %739 = vmatpush1.msra.mxu0 %v550
  %740 = vmatprep.subr.mxu0 0.0
  %741 = vmatpush1.msra.mxu0 %v545
  %742 = vmatprep.subr.mxu0 0.0
  %743 = vmatpush1.msra.mxu0 %v540
  %744 = vmatprep.subr.mxu0 0.0
  %745 = vmatpush1.msra.mxu0 %v535
  %746 = vmatprep.subr.mxu0 0.0
  %747 = vmatpush1.msra.mxu0 %v530
  %748 = vmatprep.subr.mxu0 0.0
  %749 = vmatpush1.msra.mxu0 %v525
  %750 = vmatprep.subr.mxu0 0.0
  %751 = vmatpush1.msra.mxu0 %v520
  %752 = vmatprep.subr.mxu0 0.0
  %753 = vmatpush1.msra.mxu0 %v515
  %754 = vmatprep.subr.mxu0 0.0
  %755 = vmatpush1.msra.mxu0 %v510
  %756 = vmatprep.subr.mxu0 0.0
  %757 = vmatpush1.msra.mxu0 %v505
  %758 = vmatprep.subr.mxu0 0.0
  %759 = vmatpush1.msra.mxu0 %v500
  %760 = vmatprep.subr.mxu0 0.0
  %761 = vmatpush2.msra.mxu0 %v655
  %762 = vmatprep.subr.mxu0 0.0
  %763 = vmatpush2.msra.mxu0 %v650
  %764 = vmatprep.subr.mxu0 0.0
  %765 = vmatpush2.msra.mxu0 %v645
  %766 = vmatprep.subr.mxu0 0.0
  %767 = vmatpush2.msra.mxu0 %v640
  %768 = vmatprep.subr.mxu0 0.0
  %769 = vmatpush2.msra.mxu0 %v635
  %770 = vmatprep.subr.mxu0 0.0
  %771 = vmatpush2.msra.mxu0 %v630
  %772 = vmatprep.subr.mxu0 0.0
  %773 = vmatpush2.msra.mxu0 %v625
  %774 = vmatprep.subr.mxu0 0.0
  %775 = vmatpush2.msra.mxu0 %v620
  %776 = vmatprep.subr.mxu0 0.0
  %777 = vmatpush2.msra.mxu0 %v615
  %778 = vmatprep.subr.mxu0 0.0
  %779 = vmatpush2.msra.mxu0 %v610
  %780 = vmatprep.subr.mxu0 0.0
  %781 = vmatpush2.msra.mxu0 %v605
  %782 = vmatprep.subr.mxu0 0.0
  %783 = vmatpush2.msra.mxu0 %v600
  %784 = vmatprep.subr.mxu0 0.0
  %785 = vmatpush2.msra.mxu0 %v595
  %786 = vmatprep.subr.mxu0 0.0
  %787 = vmatpush2.msra.mxu0 %v590
  %788 = vmatprep.subr.mxu0 0.0
  %789 = vmatpush2.msra.mxu0 %v585
  %790 = vmatprep.subr.mxu0 0.0
  %791 = vmatpush2.msra.mxu0 %v580
  %792 = vmatprep.mubr.f32.mxu0 1.0
  %793 = vmatmul.mubr.f32.gmra.mxu0 1.0
  %v794 = vpop.f32.mrf.mxu0
  %v795 = vadd.f32 %v725, %v794
  %v796 = vpop.f32.mrf.mxu0
  %797 = vdwg.mxu0
  %v798 = vmul.f32 %v340, %v340
  %v799 = vmul.f32 %v345, %v345
  %v800 = vmul.f32 %v350, %v350
  %v801 = vmul.f32 %v355, %v355
  %v802 = vmul.f32 %v360, %v360
  %v803 = vmul.f32 %v365, %v365
  %v804 = vmul.f32 %v370, %v370
  %v805 = vmul.f32 %v375, %v375
  %v806 = vmul.f32 %v380, %v380
  %v807 = vmul.f32 %v385, %v385
  %v808 = vmul.f32 %v390, %v390
  %v809 = vmul.f32 %v395, %v395
  %v810 = vmul.f32 %v400, %v400
  %v811 = vmul.f32 %v405, %v405
  %v812 = vmul.f32 %v410, %v410
  %v813 = vmul.f32 %v415, %v415
  %v814 = vmul.f32 %v420, %v420
  %v815 = vmul.f32 %v425, %v425
  %v816 = vmul.f32 %v430, %v430
  %v817 = vmul.f32 %v435, %v435
  %v818 = vmul.f32 %v440, %v440
  %v819 = vmul.f32 %v445, %v445
  %v820 = vmul.f32 %v450, %v450
  %v821 = vmul.f32 %v455, %v455
  %v822 = vmul.f32 %v460, %v460
  %v823 = vmul.f32 %v465, %v465
  %v824 = vmul.f32 %v470, %v470
  %v825 = vmul.f32 %v475, %v475
  %v826 = vmul.f32 %v480, %v480
  %v827 = vmul.f32 %v485, %v485
  %v828 = vmul.f32 %v490, %v490
  %v829 = vmul.f32 %v495, %v495
  %v830 = vmul.f32 %v500, %v500
  %v831 = vmul.f32 %v505, %v505
  %v832 = vmul.f32 %v510, %v510
  %v833 = vmul.f32 %v515, %v515
  %v834 = vmul.f32 %v520, %v520
  %v835 = vmul.f32 %v525, %v525
  %v836 = vmul.f32 %v530, %v530
  %v837 = vmul.f32 %v535, %v535
  %v838 = vmul.f32 %v540, %v540
  %v839 = vmul.f32 %v545, %v545
  %v840 = vmul.f32 %v550, %v550
  %v841 = vmul.f32 %v555, %v555
  %v842 = vmul.f32 %v560, %v560
  %v843 = vmul.f32 %v565, %v565
  %v844 = vmul.f32 %v570, %v570
  %v845 = vmul.f32 %v575, %v575
  %v846 = vmul.f32 %v580, %v580
  %v847 = vmul.f32 %v585, %v585
  %v848 = vmul.f32 %v590, %v590
  %v849 = vmul.f32 %v595, %v595
  %v850 = vmul.f32 %v600, %v600
  %v851 = vmul.f32 %v605, %v605
  %v852 = vmul.f32 %v610, %v610
  %v853 = vmul.f32 %v615, %v615
  %v854 = vmul.f32 %v620, %v620
  %v855 = vmul.f32 %v625, %v625
  %v856 = vmul.f32 %v630, %v630
  %v857 = vmul.f32 %v635, %v635
  %v858 = vmul.f32 %v640, %v640
  %v859 = vmul.f32 %v645, %v645
  %v860 = vmul.f32 %v650, %v650
  %v861 = vmul.f32 %v655, %v655
  %862 = vmatprep.subr.mxu0 0.0
  %863 = vmatpush1.msra.mxu0 %v813
  %864 = vmatprep.subr.mxu0 0.0
  %865 = vmatpush1.msra.mxu0 %v812
  %866 = vmatprep.subr.mxu0 0.0
  %867 = vmatpush1.msra.mxu0 %v811
  %868 = vmatprep.subr.mxu0 0.0
  %869 = vmatpush1.msra.mxu0 %v810
  %870 = vmatprep.subr.mxu0 0.0
  %871 = vmatpush1.msra.mxu0 %v809
  %872 = vmatprep.subr.mxu0 0.0
  %873 = vmatpush1.msra.mxu0 %v808
  %874 = vmatprep.subr.mxu0 0.0
  %875 = vmatpush1.msra.mxu0 %v807
  %876 = vmatprep.subr.mxu0 0.0
  %877 = vmatpush1.msra.mxu0 %v806
  %878 = vmatprep.subr.mxu0 0.0
  %879 = vmatpush1.msra.mxu0 %v805
  %880 = vmatprep.subr.mxu0 0.0
  %881 = vmatpush1.msra.mxu0 %v804
  %882 = vmatprep.subr.mxu0 0.0
  %883 = vmatpush1.msra.mxu0 %v803
  %884 = vmatprep.subr.mxu0 0.0
  %885 = vmatpush1.msra.mxu0 %v802
  %886 = vmatprep.subr.mxu0 0.0
  %887 = vmatpush1.msra.mxu0 %v801
  %888 = vmatprep.subr.mxu0 0.0
  %889 = vmatpush1.msra.mxu0 %v800
  %890 = vmatprep.subr.mxu0 0.0
  %891 = vmatpush1.msra.mxu0 %v799
  %892 = vmatprep.subr.mxu0 0.0
  %893 = vmatpush1.msra.mxu0 %v798
  %894 = vmatprep.subr.mxu0 0.0
  %895 = vmatpush2.msra.mxu0 %v829
  %896 = vmatprep.subr.mxu0 0.0
  %897 = vmatpush2.msra.mxu0 %v828
  %898 = vmatprep.subr.mxu0 0.0
  %899 = vmatpush2.msra.mxu0 %v827
  %900 = vmatprep.subr.mxu0 0.0
  %901 = vmatpush2.msra.mxu0 %v826
  %902 = vmatprep.subr.mxu0 0.0
  %903 = vmatpush2.msra.mxu0 %v825
  %904 = vmatprep.subr.mxu0 0.0
  %905 = vmatpush2.msra.mxu0 %v824
  %906 = vmatprep.subr.mxu0 0.0
  %907 = vmatpush2.msra.mxu0 %v823
  %908 = vmatprep.subr.mxu0 0.0
  %909 = vmatpush2.msra.mxu0 %v822
  %910 = vmatprep.subr.mxu0 0.0
  %911 = vmatpush2.msra.mxu0 %v821
  %912 = vmatprep.subr.mxu0 0.0
  %913 = vmatpush2.msra.mxu0 %v820
  %914 = vmatprep.subr.mxu0 0.0
  %915 = vmatpush2.msra.mxu0 %v819
  %916 = vmatprep.subr.mxu0 0.0
  %917 = vmatpush2.msra.mxu0 %v818
  %918 = vmatprep.subr.mxu0 0.0
  %919 = vmatpush2.msra.mxu0 %v817
  %920 = vmatprep.subr.mxu0 0.0
  %921 = vmatpush2.msra.mxu0 %v816
  %922 = vmatprep.subr.mxu0 0.0
  %923 = vmatpush2.msra.mxu0 %v815
  %924 = vmatprep.subr.mxu0 0.0
  %925 = vmatpush2.msra.mxu0 %v814
  %926 = vmatprep.mubr.f32.mxu0 1.0
  %927 = vmatmul.mubr.f32.gmra.mxu0 1.0
  %v928 = vpop.f32.mrf.mxu0
  %v929 = vadd.f32 0.0, %v928
  %v930 = vpop.f32.mrf.mxu0
  %931 = vdwg.mxu0
  %932 = vmatprep.subr.mxu0 0.0
  %933 = vmatpush1.msra.mxu0 %v845
  %934 = vmatprep.subr.mxu0 0.0
  %935 = vmatpush1.msra.mxu0 %v844
  %936 = vmatprep.subr.mxu0 0.0
  %937 = vmatpush1.msra.mxu0 %v843
  %938 = vmatprep.subr.mxu0 0.0
  %939 = vmatpush1.msra.mxu0 %v842
  %940 = vmatprep.subr.mxu0 0.0
  %941 = vmatpush1.msra.mxu0 %v841
  %942 = vmatprep.subr.mxu0 0.0
  %943 = vmatpush1.msra.mxu0 %v840
  %944 = vmatprep.subr.mxu0 0.0
  %945 = vmatpush1.msra.mxu0 %v839
  %946 = vmatprep.subr.mxu0 0.0
  %947 = vmatpush1.msra.mxu0 %v838
  %948 = vmatprep.subr.mxu0 0.0
  %949 = vmatpush1.msra.mxu0 %v837
  %950 = vmatprep.subr.mxu0 0.0
  %951 = vmatpush1.msra.mxu0 %v836
  %952 = vmatprep.subr.mxu0 0.0
  %953 = vmatpush1.msra.mxu0 %v835
  %954 = vmatprep.subr.mxu0 0.0
  %955 = vmatpush1.msra.mxu0 %v834
  %956 = vmatprep.subr.mxu0 0.0
  %957 = vmatpush1.msra.mxu0 %v833
  %958 = vmatprep.subr.mxu0 0.0
  %959 = vmatpush1.msra.mxu0 %v832
  %960 = vmatprep.subr.mxu0 0.0
  %961 = vmatpush1.msra.mxu0 %v831
  %962 = vmatprep.subr.mxu0 0.0
  %963 = vmatpush1.msra.mxu0 %v830
  %964 = vmatprep.subr.mxu0 0.0
  %965 = vmatpush2.msra.mxu0 %v861
  %966 = vmatprep.subr.mxu0 0.0
  %967 = vmatpush2.msra.mxu0 %v860
  %968 = vmatprep.subr.mxu0 0.0
  %969 = vmatpush2.msra.mxu0 %v859
  %970 = vmatprep.subr.mxu0 0.0
  %971 = vmatpush2.msra.mxu0 %v858
  %972 = vmatprep.subr.mxu0 0.0
  %973 = vmatpush2.msra.mxu0 %v857
  %974 = vmatprep.subr.mxu0 0.0
  %975 = vmatpush2.msra.mxu0 %v856
  %976 = vmatprep.subr.mxu0 0.0
  %977 = vmatpush2.msra.mxu0 %v855
  %978 = vmatprep.subr.mxu0 0.0
  %979 = vmatpush2.msra.mxu0 %v854
  %980 = vmatprep.subr.mxu0 0.0
  %981 = vmatpush2.msra.mxu0 %v853
  %982 = vmatprep.subr.mxu0 0.0
  %983 = vmatpush2.msra.mxu0 %v852
  %984 = vmatprep.subr.mxu0 0.0
  %985 = vmatpush2.msra.mxu0 %v851
  %986 = vmatprep.subr.mxu0 0.0
  %987 = vmatpush2.msra.mxu0 %v850
  %988 = vmatprep.subr.mxu0 0.0
  %989 = vmatpush2.msra.mxu0 %v849
  %990 = vmatprep.subr.mxu0 0.0
  %991 = vmatpush2.msra.mxu0 %v848
  %992 = vmatprep.subr.mxu0 0.0
  %993 = vmatpush2.msra.mxu0 %v847
  %994 = vmatprep.subr.mxu0 0.0
  %995 = vmatpush2.msra.mxu0 %v846
  %996 = vmatprep.mubr.f32.mxu0 1.0
  %997 = vmatmul.mubr.f32.gmra.mxu0 1.0
  %v998 = vpop.f32.mrf.mxu0
  %v999 = vadd.f32 %v929, %v998
  %v1000 = vpop.f32.mrf.mxu0
  %1001 = vdwg.mxu0
  %v1003 = vrot.slane %v999, 7
  %vm1005 = vcmask 1040384
  %v1006 = vsel %vm1005, %v795, %v1003
  %p1007 = scmp.eq.s32.totalorder 0, 0
  // Predicated region
  $region10: #{conv_block.2} parent=0 // pred_check
    %p1008 = pneg %p1007
  $region11: #{conv_block.2} parent=0 // pred_check_branch
    %1010 = sbr.rel (%p1008) target = $region13
  $region12: #{conv_block.2} parent=0 // pred_region
    %1011 = vst [vmem:[%s2] sm:$0x3] %v1006
  $region13: #{conv_block.2} parent=0 // pred_fallthru
    _
  %p1012 = scmp.gt.s32.totalorder 0, 0
  // Predicated region
  $region14: #{conv_block.2} parent=0 // pred_check
    %p1013 = pneg %p1012
  $region15: #{conv_block.2} parent=0 // pred_check_branch
    %1015 = sbr.rel (%p1013) target = $region17
  $region16: #{conv_block.2} parent=0 // pred_region
    %v1016 = vld [vmem:[%s2] sm:$0x3]
    %v1017 = vadd.f32 %v1016, %v1006
    %1018 = vst [vmem:[%s2] sm:$0x3] %v1017
  $region17: #{conv_block.2} parent=0 // pred_fallthru
    _
  // Predicated region
  $region18: #{conv_block.2} parent=0 // pred_check
    _
  $region19: #{conv_block.2} parent=0 // pred_check_branch
    %1020 = sbr.rel (0) target = $region21
  $region20: #{conv_block.2} parent=0 // pred_region
    _
  $region21: #{conv_block.2} parent=0 // pred_fallthru
    _
  // Predicated region
  $region22: #{conv_block.2} parent=0 // pred_check
    _
  $region23: #{conv_block.2} parent=0 // pred_check_branch
    %1022 = sbr.rel (0) target = $region25
  $region24: #{conv_block.2} parent=0 // pred_region
    _
  $region25: #{conv_block.2} parent=0 // pred_fallthru
    _

// kernel: conv_block.3
$region0: #{conv_block.3}
  #allocation0 [shape = 'u32[]', space=smem, size = 0x4, offset = 0x4, fixed_abs, tag = 'smem constant byte address 0x4 - core index']
  #allocation1 [shape = 'u32[144,128]{1,0:T(1,128)}', space=vmem, size = 0x12000, scoped, tag = 'internal scratch']
  %s0 = inlined_call_operand.vmem [shape: f32[512,40], index: 0, kind: input, shape index: {}]
  %s1 = inlined_call_operand.vmem [shape: f32[40,128], index: 1, kind: input, shape index: {}]
  %s2 = inlined_call_operand.vmem [shape: f32[1,128], index: 2, kind: input, shape index: {}]
  %s3 = inlined_call_operand.vmem [shape: f32[512,128], index: 3, kind: output, shape index: {}]
  %s4 = sld [smem:[#allocation0]]
  $region22: #{conv_block.3} parent=0
    _
  %s6 = ssub.s32 1, %s4
  %s7 = scalar_select 0, %s6, %s4
  // Predicated region
  $region2: #{conv_block.3} parent=0 // pred_check
    _
  $region3: #{conv_block.3} parent=0 // pred_check_branch
    %9 = sbr.rel (0) target = $region5
  $region4: #{conv_block.3} parent=0 // pred_region
    _
  $region5: #{conv_block.3} parent=0 // pred_fallthru
    _
  // Predicated region
  $region6: #{conv_block.3} parent=0 // pred_check
    _
  $region7: #{conv_block.3} parent=0 // pred_check_branch
    %11 = sbr.rel (0) target = $region9
  $region8: #{conv_block.3} parent=0 // pred_region
    _
  $region9: #{conv_block.3} parent=0 // pred_fallthru
    _
  // Predicated region
  $region10: #{conv_block.3} parent=0 // pred_check
    _
  $region11: #{conv_block.3} parent=0 // pred_check_branch
    %13 = sbr.rel (0) target = $region13
  $region12: #{conv_block.3} parent=0 // pred_region
    _
  $region13: #{conv_block.3} parent=0 // pred_fallthru
    _
  %v14 = vld [vmem:[%s0] sm:$0xff]
  %v15 = vld [vmem:[%s0 + $0x8] sm:$0xff]
  %v16 = vld [vmem:[%s0 + $0x10] sm:$0xff]
  %v17 = vld [vmem:[%s0 + $0x18] sm:$0xff]
  %v18 = vld [vmem:[%s0 + $0x20] sm:$0xff]
  %v19 = vld [vmem:[%s0 + $0x28] sm:$0xff]
  %v20 = vld [vmem:[%s0 + $0x30] sm:$0xff]
  %v21 = vld [vmem:[%s0 + $0x38] sm:$0xff]
  %v22 = vld [vmem:[%s0 + $0x40] sm:$0xff]
  %v23 = vld [vmem:[%s0 + $0x48] sm:$0xff]
  %v24 = vld [vmem:[%s0 + $0x50] sm:$0xff]
  %v25 = vld [vmem:[%s0 + $0x58] sm:$0xff]
  %v26 = vld [vmem:[%s0 + $0x60] sm:$0xff]
  %v27 = vld [vmem:[%s0 + $0x68] sm:$0xff]
  %v28 = vld [vmem:[%s0 + $0x70] sm:$0xff]
  %v29 = vld [vmem:[%s0 + $0x78] sm:$0xff]
  %v30 = vld [vmem:[%s0 + $0x80] sm:$0xff]
  %v31 = vld [vmem:[%s0 + $0x88] sm:$0xff]
  %v32 = vld [vmem:[%s0 + $0x90] sm:$0xff]
  %v33 = vld [vmem:[%s0 + $0x98] sm:$0xff]
  %v34 = vld [vmem:[%s0 + $0xa0] sm:$0xff]
  %v35 = vld [vmem:[%s0 + $0xa8] sm:$0xff]
  %v36 = vld [vmem:[%s0 + $0xb0] sm:$0xff]
  %v37 = vld [vmem:[%s0 + $0xb8] sm:$0xff]
  %v38 = vld [vmem:[%s0 + $0xc0] sm:$0xff]
  %v39 = vld [vmem:[%s0 + $0xc8] sm:$0xff]
  %v40 = vld [vmem:[%s0 + $0xd0] sm:$0xff]
  %v41 = vld [vmem:[%s0 + $0xd8] sm:$0xff]
  %v42 = vld [vmem:[%s0 + $0xe0] sm:$0xff]
  %v43 = vld [vmem:[%s0 + $0xe8] sm:$0xff]
  %v44 = vld [vmem:[%s0 + $0xf0] sm:$0xff]
  %v45 = vld [vmem:[%s0 + $0xf8] sm:$0xff]
  %v46 = vld [vmem:[%s0 + $0x100] sm:$0xff]
  %v47 = vld [vmem:[%s0 + $0x108] sm:$0xff]
  %v48 = vld [vmem:[%s0 + $0x110] sm:$0xff]
  %v49 = vld [vmem:[%s0 + $0x118] sm:$0xff]
  %v50 = vld [vmem:[%s0 + $0x120] sm:$0xff]
  %v51 = vld [vmem:[%s0 + $0x128] sm:$0xff]
  %v52 = vld [vmem:[%s0 + $0x130] sm:$0xff]
  %v53 = vld [vmem:[%s0 + $0x138] sm:$0xff]
  %v54 = vld [vmem:[%s0 + $0x140] sm:$0xff]
  %v55 = vld [vmem:[%s0 + $0x148] sm:$0xff]
  %v56 = vld [vmem:[%s0 + $0x150] sm:$0xff]
  %v57 = vld [vmem:[%s0 + $0x158] sm:$0xff]
  %v58 = vld [vmem:[%s0 + $0x160] sm:$0xff]
  %v59 = vld [vmem:[%s0 + $0x168] sm:$0xff]
  %v60 = vld [vmem:[%s0 + $0x170] sm:$0xff]
  %v61 = vld [vmem:[%s0 + $0x178] sm:$0xff]
  %v62 = vld [vmem:[%s0 + $0x180] sm:$0xff]
  %v63 = vld [vmem:[%s0 + $0x188] sm:$0xff]
  %v64 = vld [vmem:[%s0 + $0x190] sm:$0xff]
  %v65 = vld [vmem:[%s0 + $0x198] sm:$0xff]
  %v66 = vld [vmem:[%s0 + $0x1a0] sm:$0xff]
  %v67 = vld [vmem:[%s0 + $0x1a8] sm:$0xff]
  %v68 = vld [vmem:[%s0 + $0x1b0] sm:$0xff]
  %v69 = vld [vmem:[%s0 + $0x1b8] sm:$0xff]
  %v70 = vld [vmem:[%s0 + $0x1c0] sm:$0xff]
  %v71 = vld [vmem:[%s0 + $0x1c8] sm:$0xff]
  %v72 = vld [vmem:[%s0 + $0x1d0] sm:$0xff]
  %v73 = vld [vmem:[%s0 + $0x1d8] sm:$0xff]
  %v74 = vld [vmem:[%s0 + $0x1e0] sm:$0xff]
  %v75 = vld [vmem:[%s0 + $0x1e8] sm:$0xff]
  %v76 = vld [vmem:[%s0 + $0x1f0] sm:$0xff]
  %v77 = vld [vmem:[%s0 + $0x1f8] sm:$0xff]
  %v78 = vld [vmem:[%s1] sm:$0xff]
  %v79 = vld [vmem:[%s1 + $0x8] sm:$0xff]
  %v80 = vld [vmem:[%s1 + $0x10] sm:$0xff]
  %v81 = vld [vmem:[%s1 + $0x18] sm:$0xff]
  %v82 = vld [vmem:[%s1 + $0x20] sm:$0xff]
  %v83 = vld [vmem:[%s2] sm:$0x1]
  %v85 = vlaneseq
  %v86 = vshrl.u32 %v85, 7
  %v87 = vsub.s32 0, %v86
  %v88 = vrot.slane %v83, %v87
  %vm90 = vcmask 326656
  %v92 = vsel %vm90, %v14, 0
  %v95 = vsel %vm90, %v15, 0
  %v98 = vsel %vm90, %v16, 0
  %v101 = vsel %vm90, %v17, 0
  %v104 = vsel %vm90, %v18, 0
  %v107 = vsel %vm90, %v19, 0
  %v110 = vsel %vm90, %v20, 0
  %v113 = vsel %vm90, %v21, 0
  %v116 = vsel %vm90, %v22, 0
  %v119 = vsel %vm90, %v23, 0
  %v122 = vsel %vm90, %v24, 0
  %v125 = vsel %vm90, %v25, 0
  %v128 = vsel %vm90, %v26, 0
  %v131 = vsel %vm90, %v27, 0
  %v134 = vsel %vm90, %v28, 0
  %v137 = vsel %vm90, %v29, 0
  %v140 = vsel %vm90, %v30, 0
  %v143 = vsel %vm90, %v31, 0
  %v146 = vsel %vm90, %v32, 0
  %v149 = vsel %vm90, %v33, 0
  %v152 = vsel %vm90, %v34, 0
  %v155 = vsel %vm90, %v35, 0
  %v158 = vsel %vm90, %v36, 0
  %v161 = vsel %vm90, %v37, 0
  %v164 = vsel %vm90, %v38, 0
  %v167 = vsel %vm90, %v39, 0
  %v170 = vsel %vm90, %v40, 0
  %v173 = vsel %vm90, %v41, 0
  %v176 = vsel %vm90, %v42, 0
  %v179 = vsel %vm90, %v43, 0
  %v182 = vsel %vm90, %v44, 0
  %v185 = vsel %vm90, %v45, 0
  %v188 = vsel %vm90, %v46, 0
  %v191 = vsel %vm90, %v47, 0
  %v194 = vsel %vm90, %v48, 0
  %v197 = vsel %vm90, %v49, 0
  %v200 = vsel %vm90, %v50, 0
  %v203 = vsel %vm90, %v51, 0
  %v206 = vsel %vm90, %v52, 0
  %v209 = vsel %vm90, %v53, 0
  %v212 = vsel %vm90, %v54, 0
  %v215 = vsel %vm90, %v55, 0
  %v218 = vsel %vm90, %v56, 0
  %v221 = vsel %vm90, %v57, 0
  %v224 = vsel %vm90, %v58, 0
  %v227 = vsel %vm90, %v59, 0
  %v230 = vsel %vm90, %v60, 0
  %v233 = vsel %vm90, %v61, 0
  %v236 = vsel %vm90, %v62, 0
  %v239 = vsel %vm90, %v63, 0
  %v242 = vsel %vm90, %v64, 0
  %v245 = vsel %vm90, %v65, 0
  %v248 = vsel %vm90, %v66, 0
  %v251 = vsel %vm90, %v67, 0
  %v254 = vsel %vm90, %v68, 0
  %v257 = vsel %vm90, %v69, 0
  %v260 = vsel %vm90, %v70, 0
  %v263 = vsel %vm90, %v71, 0
  %v266 = vsel %vm90, %v72, 0
  %v269 = vsel %vm90, %v73, 0
  %v272 = vsel %vm90, %v74, 0
  %v275 = vsel %vm90, %v75, 0
  %v278 = vsel %vm90, %v76, 0
  %v281 = vsel %vm90, %v77, 0
  %283 = vmatprep.subr.mxu0 0.0
  %284 = vmatpush1.msra.mxu0 0.0
  %285 = vmatprep.subr.mxu0 0.0
  %286 = vmatpush1.msra.mxu0 0.0
  %287 = vmatprep.subr.mxu0 0.0
  %288 = vmatpush1.msra.mxu0 0.0
  %289 = vmatprep.subr.mxu0 0.0
  %290 = vmatpush1.msra.mxu0 0.0
  %291 = vmatprep.subr.mxu0 0.0
  %292 = vmatpush1.msra.mxu0 0.0
  %293 = vmatprep.subr.mxu0 0.0
  %294 = vmatpush1.msra.mxu0 0.0
  %295 = vmatprep.subr.mxu0 0.0
  %296 = vmatpush1.msra.mxu0 0.0
  %297 = vmatprep.subr.mxu0 0.0
  %298 = vmatpush1.msra.mxu0 0.0
  %299 = vmatprep.subr.mxu0 0.0
  %300 = vmatpush1.msra.mxu0 0.0
  %301 = vmatprep.subr.mxu0 0.0
  %302 = vmatpush1.msra.mxu0 0.0
  %303 = vmatprep.subr.mxu0 0.0
  %304 = vmatpush1.msra.mxu0 0.0
  %305 = vmatprep.subr.mxu0 0.0
  %306 = vmatpush1.msra.mxu0 %v82
  %307 = vmatprep.subr.mxu0 0.0
  %308 = vmatpush1.msra.mxu0 %v81
  %309 = vmatprep.subr.mxu0 0.0
  %310 = vmatpush1.msra.mxu0 %v80
  %311 = vmatprep.subr.mxu0 0.0
  %312 = vmatpush1.msra.mxu0 %v79
  %313 = vmatprep.subr.mxu0 0.0
  %314 = vmatpush1.msra.mxu0 %v78
  %315 = vmatprep.subr.mxu0 0.0
  %316 = vmatpush2.msra.mxu0 0.0
  %317 = vmatprep.subr.mxu0 0.0
  %318 = vmatpush2.msra.mxu0 0.0
  %319 = vmatprep.subr.mxu0 0.0
  %320 = vmatpush2.msra.mxu0 0.0
  %321 = vmatprep.subr.mxu0 0.0
  %322 = vmatpush2.msra.mxu0 0.0
  %323 = vmatprep.subr.mxu0 0.0
  %324 = vmatpush2.msra.mxu0 0.0
  %325 = vmatprep.subr.mxu0 0.0
  %326 = vmatpush2.msra.mxu0 0.0
  %327 = vmatprep.subr.mxu0 0.0
  %328 = vmatpush2.msra.mxu0 0.0
  %329 = vmatprep.subr.mxu0 0.0
  %330 = vmatpush2.msra.mxu0 0.0
  %331 = vmatprep.subr.mxu0 0.0
  %332 = vmatpush2.msra.mxu0 0.0
  %333 = vmatprep.subr.mxu0 0.0
  %334 = vmatpush2.msra.mxu0 0.0
  %335 = vmatprep.subr.mxu0 0.0
  %336 = vmatpush2.msra.mxu0 0.0
  %337 = vmatprep.subr.mxu0 0.0
  %338 = vmatpush2.msra.mxu0 0.0
  %339 = vmatprep.subr.mxu0 0.0
  %340 = vmatpush2.msra.mxu0 0.0
  %341 = vmatprep.subr.mxu0 0.0
  %342 = vmatpush2.msra.mxu0 0.0
  %343 = vmatprep.subr.mxu0 0.0
  %344 = vmatpush2.msra.mxu0 0.0
  %345 = vmatprep.subr.mxu0 0.0
  %346 = vmatpush2.msra.mxu0 0.0
  %347 = vmatprep.mubr.f32.mxu0 0.0
  %348 = vmatmul.mubr.f32.gmra.mxu0 %v92
  %v349 = vpop.f32.mrf.mxu0
  %v350 = vadd.f32 %v88, %v349
  %v351 = vpop.f32.mrf.mxu0
  %352 = vmatprep.mubr.f32.mxu0 0.0
  %353 = vmatmul.mubr.f32.gmra.mxu0 %v95
  %v354 = vpop.f32.mrf.mxu0
  %v355 = vadd.f32 %v88, %v354
  %v356 = vpop.f32.mrf.mxu0
  %357 = vmatprep.mubr.f32.mxu0 0.0
  %358 = vmatmul.mubr.f32.gmra.mxu0 %v98
  %v359 = vpop.f32.mrf.mxu0
  %v360 = vadd.f32 %v88, %v359
  %v361 = vpop.f32.mrf.mxu0
  %362 = vmatprep.mubr.f32.mxu0 0.0
  %363 = vmatmul.mubr.f32.gmra.mxu0 %v101
  %v364 = vpop.f32.mrf.mxu0
  %v365 = vadd.f32 %v88, %v364
  %v366 = vpop.f32.mrf.mxu0
  %367 = vmatprep.mubr.f32.mxu0 0.0
  %368 = vmatmul.mubr.f32.gmra.mxu0 %v104
  %v369 = vpop.f32.mrf.mxu0
  %v370 = vadd.f32 %v88, %v369
  %v371 = vpop.f32.mrf.mxu0
  %372 = vmatprep.mubr.f32.mxu0 0.0
  %373 = vmatmul.mubr.f32.gmra.mxu0 %v107
  %v374 = vpop.f32.mrf.mxu0
  %v375 = vadd.f32 %v88, %v374
  %v376 = vpop.f32.mrf.mxu0
  %377 = vmatprep.mubr.f32.mxu0 0.0
  %378 = vmatmul.mubr.f32.gmra.mxu0 %v110
  %v379 = vpop.f32.mrf.mxu0
  %v380 = vadd.f32 %v88, %v379
  %v381 = vpop.f32.mrf.mxu0
  %382 = vmatprep.mubr.f32.mxu0 0.0
  %383 = vmatmul.mubr.f32.gmra.mxu0 %v113
  %v384 = vpop.f32.mrf.mxu0
  %v385 = vadd.f32 %v88, %v384
  %v386 = vpop.f32.mrf.mxu0
  %387 = vmatprep.mubr.f32.mxu0 0.0
  %388 = vmatmul.mubr.f32.gmra.mxu0 %v116
  %v389 = vpop.f32.mrf.mxu0
  %v390 = vadd.f32 %v88, %v389
  %v391 = vpop.f32.mrf.mxu0
  %392 = vmatprep.mubr.f32.mxu0 0.0
  %393 = vmatmul.mubr.f32.gmra.mxu0 %v119
  %v394 = vpop.f32.mrf.mxu0
  %v395 = vadd.f32 %v88, %v394
  %v396 = vpop.f32.mrf.mxu0
  %397 = vmatprep.mubr.f32.mxu0 0.0
  %398 = vmatmul.mubr.f32.gmra.mxu0 %v122
  %v399 = vpop.f32.mrf.mxu0
  %v400 = vadd.f32 %v88, %v399
  %v401 = vpop.f32.mrf.mxu0
  %402 = vmatprep.mubr.f32.mxu0 0.0
  %403 = vmatmul.mubr.f32.gmra.mxu0 %v125
  %v404 = vpop.f32.mrf.mxu0
  %v405 = vadd.f32 %v88, %v404
  %v406 = vpop.f32.mrf.mxu0
  %407 = vmatprep.mubr.f32.mxu0 0.0
  %408 = vmatmul.mubr.f32.gmra.mxu0 %v128
  %v409 = vpop.f32.mrf.mxu0
  %v410 = vadd.f32 %v88, %v409
  %v411 = vpop.f32.mrf.mxu0
  %412 = vmatprep.mubr.f32.mxu0 0.0
  %413 = vmatmul.mubr.f32.gmra.mxu0 %v131
  %v414 = vpop.f32.mrf.mxu0
  %v415 = vadd.f32 %v88, %v414
  %v416 = vpop.f32.mrf.mxu0
  %417 = vmatprep.mubr.f32.mxu0 0.0
  %418 = vmatmul.mubr.f32.gmra.mxu0 %v134
  %v419 = vpop.f32.mrf.mxu0
  %v420 = vadd.f32 %v88, %v419
  %v421 = vpop.f32.mrf.mxu0
  %422 = vmatprep.mubr.f32.mxu0 0.0
  %423 = vmatmul.mubr.f32.gmra.mxu0 %v137
  %v424 = vpop.f32.mrf.mxu0
  %v425 = vadd.f32 %v88, %v424
  %v426 = vpop.f32.mrf.mxu0
  %427 = vmatprep.mubr.f32.mxu0 0.0
  %428 = vmatmul.mubr.f32.gmra.mxu0 %v140
  %v429 = vpop.f32.mrf.mxu0
  %v430 = vadd.f32 %v88, %v429
  %v431 = vpop.f32.mrf.mxu0
  %432 = vmatprep.mubr.f32.mxu0 0.0
  %433 = vmatmul.mubr.f32.gmra.mxu0 %v143
  %v434 = vpop.f32.mrf.mxu0
  %v435 = vadd.f32 %v88, %v434
  %v436 = vpop.f32.mrf.mxu0
  %437 = vmatprep.mubr.f32.mxu0 0.0
  %438 = vmatmul.mubr.f32.gmra.mxu0 %v146
  %v439 = vpop.f32.mrf.mxu0
  %v440 = vadd.f32 %v88, %v439
  %v441 = vpop.f32.mrf.mxu0
  %442 = vmatprep.mubr.f32.mxu0 0.0
  %443 = vmatmul.mubr.f32.gmra.mxu0 %v149
  %v444 = vpop.f32.mrf.mxu0
  %v445 = vadd.f32 %v88, %v444
  %v446 = vpop.f32.mrf.mxu0
  %447 = vmatprep.mubr.f32.mxu0 0.0
  %448 = vmatmul.mubr.f32.gmra.mxu0 %v152
  %v449 = vpop.f32.mrf.mxu0
  %v450 = vadd.f32 %v88, %v449
  %v451 = vpop.f32.mrf.mxu0
  %452 = vmatprep.mubr.f32.mxu0 0.0
  %453 = vmatmul.mubr.f32.gmra.mxu0 %v155
  %v454 = vpop.f32.mrf.mxu0
  %v455 = vadd.f32 %v88, %v454
  %v456 = vpop.f32.mrf.mxu0
  %457 = vmatprep.mubr.f32.mxu0 0.0
  %458 = vmatmul.mubr.f32.gmra.mxu0 %v158
  %v459 = vpop.f32.mrf.mxu0
  %v460 = vadd.f32 %v88, %v459
  %v461 = vpop.f32.mrf.mxu0
  %462 = vmatprep.mubr.f32.mxu0 0.0
  %463 = vmatmul.mubr.f32.gmra.mxu0 %v161
  %v464 = vpop.f32.mrf.mxu0
  %v465 = vadd.f32 %v88, %v464
  %v466 = vpop.f32.mrf.mxu0
  %467 = vmatprep.mubr.f32.mxu0 0.0
  %468 = vmatmul.mubr.f32.gmra.mxu0 %v164
  %v469 = vpop.f32.mrf.mxu0
  %v470 = vadd.f32 %v88, %v469
  %v471 = vpop.f32.mrf.mxu0
  %472 = vmatprep.mubr.f32.mxu0 0.0
  %473 = vmatmul.mubr.f32.gmra.mxu0 %v167
  %v474 = vpop.f32.mrf.mxu0
  %v475 = vadd.f32 %v88, %v474
  %v476 = vpop.f32.mrf.mxu0
  %477 = vmatprep.mubr.f32.mxu0 0.0
  %478 = vmatmul.mubr.f32.gmra.mxu0 %v170
  %v479 = vpop.f32.mrf.mxu0
  %v480 = vadd.f32 %v88, %v479
  %v481 = vpop.f32.mrf.mxu0
  %482 = vmatprep.mubr.f32.mxu0 0.0
  %483 = vmatmul.mubr.f32.gmra.mxu0 %v173
  %v484 = vpop.f32.mrf.mxu0
  %v485 = vadd.f32 %v88, %v484
  %v486 = vpop.f32.mrf.mxu0
  %487 = vmatprep.mubr.f32.mxu0 0.0
  %488 = vmatmul.mubr.f32.gmra.mxu0 %v176
  %v489 = vpop.f32.mrf.mxu0
  %v490 = vadd.f32 %v88, %v489
  %v491 = vpop.f32.mrf.mxu0
  %492 = vmatprep.mubr.f32.mxu0 0.0
  %493 = vmatmul.mubr.f32.gmra.mxu0 %v179
  %v494 = vpop.f32.mrf.mxu0
  %v495 = vadd.f32 %v88, %v494
  %v496 = vpop.f32.mrf.mxu0
  %497 = vmatprep.mubr.f32.mxu0 0.0
  %498 = vmatmul.mubr.f32.gmra.mxu0 %v182
  %v499 = vpop.f32.mrf.mxu0
  %v500 = vadd.f32 %v88, %v499
  %v501 = vpop.f32.mrf.mxu0
  %502 = vmatprep.mubr.f32.mxu0 0.0
  %503 = vmatmul.mubr.f32.gmra.mxu0 %v185
  %v504 = vpop.f32.mrf.mxu0
  %v505 = vadd.f32 %v88, %v504
  %v506 = vpop.f32.mrf.mxu0
  %507 = vmatprep.mubr.f32.mxu0 0.0
  %508 = vmatmul.mubr.f32.gmra.mxu0 %v188
  %v509 = vpop.f32.mrf.mxu0
  %v510 = vadd.f32 %v88, %v509
  %v511 = vpop.f32.mrf.mxu0
  %512 = vmatprep.mubr.f32.mxu0 0.0
  %513 = vmatmul.mubr.f32.gmra.mxu0 %v191
  %v514 = vpop.f32.mrf.mxu0
  %v515 = vadd.f32 %v88, %v514
  %v516 = vpop.f32.mrf.mxu0
  %517 = vmatprep.mubr.f32.mxu0 0.0
  %518 = vmatmul.mubr.f32.gmra.mxu0 %v194
  %v519 = vpop.f32.mrf.mxu0
  %v520 = vadd.f32 %v88, %v519
  %v521 = vpop.f32.mrf.mxu0
  %522 = vmatprep.mubr.f32.mxu0 0.0
  %523 = vmatmul.mubr.f32.gmra.mxu0 %v197
  %v524 = vpop.f32.mrf.mxu0
  %v525 = vadd.f32 %v88, %v524
  %v526 = vpop.f32.mrf.mxu0
  %527 = vmatprep.mubr.f32.mxu0 0.0
  %528 = vmatmul.mubr.f32.gmra.mxu0 %v200
  %v529 = vpop.f32.mrf.mxu0
  %v530 = vadd.f32 %v88, %v529
  %v531 = vpop.f32.mrf.mxu0
  %532 = vmatprep.mubr.f32.mxu0 0.0
  %533 = vmatmul.mubr.f32.gmra.mxu0 %v203
  %v534 = vpop.f32.mrf.mxu0
  %v535 = vadd.f32 %v88, %v534
  %v536 = vpop.f32.mrf.mxu0
  %537 = vmatprep.mubr.f32.mxu0 0.0
  %538 = vmatmul.mubr.f32.gmra.mxu0 %v206
  %v539 = vpop.f32.mrf.mxu0
  %v540 = vadd.f32 %v88, %v539
  %v541 = vpop.f32.mrf.mxu0
  %542 = vmatprep.mubr.f32.mxu0 0.0
  %543 = vmatmul.mubr.f32.gmra.mxu0 %v209
  %v544 = vpop.f32.mrf.mxu0
  %v545 = vadd.f32 %v88, %v544
  %v546 = vpop.f32.mrf.mxu0
  %547 = vmatprep.mubr.f32.mxu0 0.0
  %548 = vmatmul.mubr.f32.gmra.mxu0 %v212
  %v549 = vpop.f32.mrf.mxu0
  %v550 = vadd.f32 %v88, %v549
  %v551 = vpop.f32.mrf.mxu0
  %552 = vmatprep.mubr.f32.mxu0 0.0
  %553 = vmatmul.mubr.f32.gmra.mxu0 %v215
  %v554 = vpop.f32.mrf.mxu0
  %v555 = vadd.f32 %v88, %v554
  %v556 = vpop.f32.mrf.mxu0
  %557 = vmatprep.mubr.f32.mxu0 0.0
  %558 = vmatmul.mubr.f32.gmra.mxu0 %v218
  %v559 = vpop.f32.mrf.mxu0
  %v560 = vadd.f32 %v88, %v559
  %v561 = vpop.f32.mrf.mxu0
  %562 = vmatprep.mubr.f32.mxu0 0.0
  %563 = vmatmul.mubr.f32.gmra.mxu0 %v221
  %v564 = vpop.f32.mrf.mxu0
  %v565 = vadd.f32 %v88, %v564
  %v566 = vpop.f32.mrf.mxu0
  %567 = vmatprep.mubr.f32.mxu0 0.0
  %568 = vmatmul.mubr.f32.gmra.mxu0 %v224
  %v569 = vpop.f32.mrf.mxu0
  %v570 = vadd.f32 %v88, %v569
  %v571 = vpop.f32.mrf.mxu0
  %572 = vmatprep.mubr.f32.mxu0 0.0
  %573 = vmatmul.mubr.f32.gmra.mxu0 %v227
  %v574 = vpop.f32.mrf.mxu0
  %v575 = vadd.f32 %v88, %v574
  %v576 = vpop.f32.mrf.mxu0
  %577 = vmatprep.mubr.f32.mxu0 0.0
  %578 = vmatmul.mubr.f32.gmra.mxu0 %v230
  %v579 = vpop.f32.mrf.mxu0
  %v580 = vadd.f32 %v88, %v579
  %v581 = vpop.f32.mrf.mxu0
  %582 = vmatprep.mubr.f32.mxu0 0.0
  %583 = vmatmul.mubr.f32.gmra.mxu0 %v233
  %v584 = vpop.f32.mrf.mxu0
  %v585 = vadd.f32 %v88, %v584
  %v586 = vpop.f32.mrf.mxu0
  %587 = vmatprep.mubr.f32.mxu0 0.0
  %588 = vmatmul.mubr.f32.gmra.mxu0 %v236
  %v589 = vpop.f32.mrf.mxu0
  %v590 = vadd.f32 %v88, %v589
  %v591 = vpop.f32.mrf.mxu0
  %592 = vmatprep.mubr.f32.mxu0 0.0
  %593 = vmatmul.mubr.f32.gmra.mxu0 %v239
  %v594 = vpop.f32.mrf.mxu0
  %v595 = vadd.f32 %v88, %v594
  %v596 = vpop.f32.mrf.mxu0
  %597 = vmatprep.mubr.f32.mxu0 0.0
  %598 = vmatmul.mubr.f32.gmra.mxu0 %v242
  %v599 = vpop.f32.mrf.mxu0
  %v600 = vadd.f32 %v88, %v599
  %v601 = vpop.f32.mrf.mxu0
  %602 = vmatprep.mubr.f32.mxu0 0.0
  %603 = vmatmul.mubr.f32.gmra.mxu0 %v245
  %v604 = vpop.f32.mrf.mxu0
  %v605 = vadd.f32 %v88, %v604
  %v606 = vpop.f32.mrf.mxu0
  %607 = vmatprep.mubr.f32.mxu0 0.0
  %608 = vmatmul.mubr.f32.gmra.mxu0 %v248
  %v609 = vpop.f32.mrf.mxu0
  %v610 = vadd.f32 %v88, %v609
  %v611 = vpop.f32.mrf.mxu0
  %612 = vmatprep.mubr.f32.mxu0 0.0
  %613 = vmatmul.mubr.f32.gmra.mxu0 %v251
  %v614 = vpop.f32.mrf.mxu0
  %v615 = vadd.f32 %v88, %v614
  %v616 = vpop.f32.mrf.mxu0
  %617 = vmatprep.mubr.f32.mxu0 0.0
  %618 = vmatmul.mubr.f32.gmra.mxu0 %v254
  %v619 = vpop.f32.mrf.mxu0
  %v620 = vadd.f32 %v88, %v619
  %v621 = vpop.f32.mrf.mxu0
  %622 = vmatprep.mubr.f32.mxu0 0.0
  %623 = vmatmul.mubr.f32.gmra.mxu0 %v257
  %v624 = vpop.f32.mrf.mxu0
  %v625 = vadd.f32 %v88, %v624
  %v626 = vpop.f32.mrf.mxu0
  %627 = vmatprep.mubr.f32.mxu0 0.0
  %628 = vmatmul.mubr.f32.gmra.mxu0 %v260
  %v629 = vpop.f32.mrf.mxu0
  %v630 = vadd.f32 %v88, %v629
  %v631 = vpop.f32.mrf.mxu0
  %632 = vmatprep.mubr.f32.mxu0 0.0
  %633 = vmatmul.mubr.f32.gmra.mxu0 %v263
  %v634 = vpop.f32.mrf.mxu0
  %v635 = vadd.f32 %v88, %v634
  %v636 = vpop.f32.mrf.mxu0
  %637 = vmatprep.mubr.f32.mxu0 0.0
  %638 = vmatmul.mubr.f32.gmra.mxu0 %v266
  %v639 = vpop.f32.mrf.mxu0
  %v640 = vadd.f32 %v88, %v639
  %v641 = vpop.f32.mrf.mxu0
  %642 = vmatprep.mubr.f32.mxu0 0.0
  %643 = vmatmul.mubr.f32.gmra.mxu0 %v269
  %v644 = vpop.f32.mrf.mxu0
  %v645 = vadd.f32 %v88, %v644
  %v646 = vpop.f32.mrf.mxu0
  %647 = vmatprep.mubr.f32.mxu0 0.0
  %648 = vmatmul.mubr.f32.gmra.mxu0 %v272
  %v649 = vpop.f32.mrf.mxu0
  %v650 = vadd.f32 %v88, %v649
  %v651 = vpop.f32.mrf.mxu0
  %652 = vmatprep.mubr.f32.mxu0 0.0
  %653 = vmatmul.mubr.f32.gmra.mxu0 %v275
  %v654 = vpop.f32.mrf.mxu0
  %v655 = vadd.f32 %v88, %v654
  %v656 = vpop.f32.mrf.mxu0
  %657 = vmatprep.mubr.f32.mxu0 0.0
  %658 = vmatmul.mubr.f32.gmra.mxu0 %v278
  %v659 = vpop.f32.mrf.mxu0
  %v660 = vadd.f32 %v88, %v659
  %v661 = vpop.f32.mrf.mxu0
  %662 = vmatprep.mubr.f32.mxu0 0.0
  %663 = vmatmul.mubr.f32.gmra.mxu0 %v281
  %v664 = vpop.f32.mrf.mxu0
  %v665 = vadd.f32 %v88, %v664
  %v666 = vpop.f32.mrf.mxu0
  %667 = vdwg.mxu0
  %v668 = vmax.f32 %v350, 0.0
  %v669 = vmax.f32 %v355, 0.0
  %v670 = vmax.f32 %v360, 0.0
  %v671 = vmax.f32 %v365, 0.0
  %v672 = vmax.f32 %v370, 0.0
  %v673 = vmax.f32 %v375, 0.0
  %v674 = vmax.f32 %v380, 0.0
  %v675 = vmax.f32 %v385, 0.0
  %v676 = vmax.f32 %v390, 0.0
  %v677 = vmax.f32 %v395, 0.0
  %v678 = vmax.f32 %v400, 0.0
  %v679 = vmax.f32 %v405, 0.0
  %v680 = vmax.f32 %v410, 0.0
  %v681 = vmax.f32 %v415, 0.0
  %v682 = vmax.f32 %v420, 0.0
  %v683 = vmax.f32 %v425, 0.0
  %v684 = vmax.f32 %v430, 0.0
  %v685 = vmax.f32 %v435, 0.0
  %v686 = vmax.f32 %v440, 0.0
  %v687 = vmax.f32 %v445, 0.0
  %v688 = vmax.f32 %v450, 0.0
  %v689 = vmax.f32 %v455, 0.0
  %v690 = vmax.f32 %v460, 0.0
  %v691 = vmax.f32 %v465, 0.0
  %v692 = vmax.f32 %v470, 0.0
  %v693 = vmax.f32 %v475, 0.0
  %v694 = vmax.f32 %v480, 0.0
  %v695 = vmax.f32 %v485, 0.0
  %v696 = vmax.f32 %v490, 0.0
  %v697 = vmax.f32 %v495, 0.0
  %v698 = vmax.f32 %v500, 0.0
  %v699 = vmax.f32 %v505, 0.0
  %v700 = vmax.f32 %v510, 0.0
  %v701 = vmax.f32 %v515, 0.0
  %v702 = vmax.f32 %v520, 0.0
  %v703 = vmax.f32 %v525, 0.0
  %v704 = vmax.f32 %v530, 0.0
  %v705 = vmax.f32 %v535, 0.0
  %v706 = vmax.f32 %v540, 0.0
  %v707 = vmax.f32 %v545, 0.0
  %v708 = vmax.f32 %v550, 0.0
  %v709 = vmax.f32 %v555, 0.0
  %v710 = vmax.f32 %v560, 0.0
  %v711 = vmax.f32 %v565, 0.0
  %v712 = vmax.f32 %v570, 0.0
  %v713 = vmax.f32 %v575, 0.0
  %v714 = vmax.f32 %v580, 0.0
  %v715 = vmax.f32 %v585, 0.0
  %v716 = vmax.f32 %v590, 0.0
  %v717 = vmax.f32 %v595, 0.0
  %v718 = vmax.f32 %v600, 0.0
  %v719 = vmax.f32 %v605, 0.0
  %v720 = vmax.f32 %v610, 0.0
  %v721 = vmax.f32 %v615, 0.0
  %v722 = vmax.f32 %v620, 0.0
  %v723 = vmax.f32 %v625, 0.0
  %v724 = vmax.f32 %v630, 0.0
  %v725 = vmax.f32 %v635, 0.0
  %v726 = vmax.f32 %v640, 0.0
  %v727 = vmax.f32 %v645, 0.0
  %v728 = vmax.f32 %v650, 0.0
  %v729 = vmax.f32 %v655, 0.0
  %v730 = vmax.f32 %v660, 0.0
  %v731 = vmax.f32 %v665, 0.0
  %732 = vst [vmem:[%s3] sm:$0xff] %v668
  %733 = vst [vmem:[%s3 + $0x8] sm:$0xff] %v669
  %734 = vst [vmem:[%s3 + $0x10] sm:$0xff] %v670
  %735 = vst [vmem:[%s3 + $0x18] sm:$0xff] %v671
  %736 = vst [vmem:[%s3 + $0x20] sm:$0xff] %v672
  %737 = vst [vmem:[%s3 + $0x28] sm:$0xff] %v673
  %738 = vst [vmem:[%s3 + $0x30] sm:$0xff] %v674
  %739 = vst [vmem:[%s3 + $0x38] sm:$0xff] %v675
  %740 = vst [vmem:[%s3 + $0x40] sm:$0xff] %v676
  %741 = vst [vmem:[%s3 + $0x48] sm:$0xff] %v677
  %742 = vst [vmem:[%s3 + $0x50] sm:$0xff] %v678
  %743 = vst [vmem:[%s3 + $0x58] sm:$0xff] %v679
  %744 = vst [vmem:[%s3 + $0x60] sm:$0xff] %v680
  %745 = vst [vmem:[%s3 + $0x68] sm:$0xff] %v681
  %746 = vst [vmem:[%s3 + $0x70] sm:$0xff] %v682
  %747 = vst [vmem:[%s3 + $0x78] sm:$0xff] %v683
  %748 = vst [vmem:[%s3 + $0x80] sm:$0xff] %v684
  %749 = vst [vmem:[%s3 + $0x88] sm:$0xff] %v685
  %750 = vst [vmem:[%s3 + $0x90] sm:$0xff] %v686
  %751 = vst [vmem:[%s3 + $0x98] sm:$0xff] %v687
  %752 = vst [vmem:[%s3 + $0xa0] sm:$0xff] %v688
  %753 = vst [vmem:[%s3 + $0xa8] sm:$0xff] %v689
  %754 = vst [vmem:[%s3 + $0xb0] sm:$0xff] %v690
  %755 = vst [vmem:[%s3 + $0xb8] sm:$0xff] %v691
  %756 = vst [vmem:[%s3 + $0xc0] sm:$0xff] %v692
  %757 = vst [vmem:[%s3 + $0xc8] sm:$0xff] %v693
  %758 = vst [vmem:[%s3 + $0xd0] sm:$0xff] %v694
  %759 = vst [vmem:[%s3 + $0xd8] sm:$0xff] %v695
  %760 = vst [vmem:[%s3 + $0xe0] sm:$0xff] %v696
  %761 = vst [vmem:[%s3 + $0xe8] sm:$0xff] %v697
  %762 = vst [vmem:[%s3 + $0xf0] sm:$0xff] %v698
  %763 = vst [vmem:[%s3 + $0xf8] sm:$0xff] %v699
  %764 = vst [vmem:[%s3 + $0x100] sm:$0xff] %v700
  %765 = vst [vmem:[%s3 + $0x108] sm:$0xff] %v701
  %766 = vst [vmem:[%s3 + $0x110] sm:$0xff] %v702
  %767 = vst [vmem:[%s3 + $0x118] sm:$0xff] %v703
  %768 = vst [vmem:[%s3 + $0x120] sm:$0xff] %v704
  %769 = vst [vmem:[%s3 + $0x128] sm:$0xff] %v705
  %770 = vst [vmem:[%s3 + $0x130] sm:$0xff] %v706
  %771 = vst [vmem:[%s3 + $0x138] sm:$0xff] %v707
  %772 = vst [vmem:[%s3 + $0x140] sm:$0xff] %v708
  %773 = vst [vmem:[%s3 + $0x148] sm:$0xff] %v709
  %774 = vst [vmem:[%s3 + $0x150] sm:$0xff] %v710
  %775 = vst [vmem:[%s3 + $0x158] sm:$0xff] %v711
  %776 = vst [vmem:[%s3 + $0x160] sm:$0xff] %v712
  %777 = vst [vmem:[%s3 + $0x168] sm:$0xff] %v713
  %778 = vst [vmem:[%s3 + $0x170] sm:$0xff] %v714
  %779 = vst [vmem:[%s3 + $0x178] sm:$0xff] %v715
  %780 = vst [vmem:[%s3 + $0x180] sm:$0xff] %v716
  %781 = vst [vmem:[%s3 + $0x188] sm:$0xff] %v717
  %782 = vst [vmem:[%s3 + $0x190] sm:$0xff] %v718
  %783 = vst [vmem:[%s3 + $0x198] sm:$0xff] %v719
  %784 = vst [vmem:[%s3 + $0x1a0] sm:$0xff] %v720
  %785 = vst [vmem:[%s3 + $0x1a8] sm:$0xff] %v721
  %786 = vst [vmem:[%s3 + $0x1b0] sm:$0xff] %v722
  %787 = vst [vmem:[%s3 + $0x1b8] sm:$0xff] %v723
  %788 = vst [vmem:[%s3 + $0x1c0] sm:$0xff] %v724
  %789 = vst [vmem:[%s3 + $0x1c8] sm:$0xff] %v725
  %790 = vst [vmem:[%s3 + $0x1d0] sm:$0xff] %v726
  %791 = vst [vmem:[%s3 + $0x1d8] sm:$0xff] %v727
  %792 = vst [vmem:[%s3 + $0x1e0] sm:$0xff] %v728
  %793 = vst [vmem:[%s3 + $0x1e8] sm:$0xff] %v729
  %794 = vst [vmem:[%s3 + $0x1f0] sm:$0xff] %v730
  %795 = vst [vmem:[%s3 + $0x1f8] sm:$0xff] %v731
  // Predicated region
  $region14: #{conv_block.3} parent=0 // pred_check
    _
  $region15: #{conv_block.3} parent=0 // pred_check_branch
    %797 = sbr.rel (0) target = $region17
  $region16: #{conv_block.3} parent=0 // pred_region
    _
  $region17: #{conv_block.3} parent=0 // pred_fallthru
    _
  // Predicated region
  $region18: #{conv_block.3} parent=0 // pred_check
    _
  $region19: #{conv_block.3} parent=0 // pred_check_branch
    %799 = sbr.rel (0) target = $region21
  $region20: #{conv_block.3} parent=0 // pred_region
    _
  $region21: #{conv_block.3} parent=0 // pred_fallthru
    _

</llo_original>
